<compile_context>
chip_gen: v6e
topology: v6e:2x2x1
jax: 0.10.0
libtpu: 0.0.40
codegen_flags: <defaults>
</compile_context>

<pallas_src>
import functools

import jax
import jax.numpy as jnp
from jax.experimental import pallas as pl
from jax.experimental.pallas import tpu as pltpu

LANE = 128     # lane width: padded feature dim kept lane-dense
SUBLANE = 8    # f32 sublane granularity for the batch dim


def _round_up(x, m):
    return (x + m - 1) // m * m


def _device_kind():
    try:
        return (jax.devices()[0].device_kind or "").lower()
    except Exception:
        return ""


def policy_kernel(x_ref, w_in_ref, w_rest_ref, b_ref, out_ref, *,
                  n_rest, n_actions, exp_dtype):
    """MLP forward + masked softmax on one [tile, *] batch block.

    x_ref      : [tile, n_obs]            f32  (unpadded features)
    w_in_ref   : [n_obs, dpad]            bf16 (input-layer weight, resident)
    w_rest_ref : [n_rest, dpad, dpad]     bf16 (hidden + output weights, resident)
    b_ref      : [n_rest + 1, 1, dpad]    f32  (all biases, resident)
    out_ref    : [tile, dpad]             bf16 (lane-dense; first n_actions cols valid)
    """
    # Input layer: narrow-K matmul (K = n_obs), bf16 operands, f32 accumulation.
    h = jnp.dot(x_ref[...].astype(jnp.bfloat16), w_in_ref[...],
                preferred_element_type=jnp.float32) + b_ref[0]
    h = jnp.maximum(h, 0.0)  # ReLU (VPU, f32)

    # Hidden layers + output layer (zero padding keeps valid columns exact).
    for i in range(n_rest):
        h = jnp.dot(h.astype(jnp.bfloat16), w_rest_ref[i],
                    preferred_element_type=jnp.float32) + b_ref[i + 1]
        if i < n_rest - 1:
            h = jnp.maximum(h, 0.0)

    # Numerically stable softmax restricted to the n_actions valid lanes.
    col = jax.lax.broadcasted_iota(jnp.int32, h.shape, 1)
    logits = jnp.where(col < n_actions, h, -1e30)
    m = jnp.max(logits, axis=-1, keepdims=True)
    shifted = logits - m                                    # f32
    # exp in bf16 on v6e/v7x (EUP bf16 path), f32 on v5e; sum stays f32.
    e = jnp.exp(shifted.astype(exp_dtype)).astype(jnp.float32)
    denom = jnp.sum(e, axis=-1, keepdims=True)
    probs = e * pl.reciprocal(denom, approx=False)          # exact: rows sum to ~1
    out_ref[...] = probs.astype(out_ref.dtype)


def pack_params(params, dpad):
    """Split off the input-layer weight; stack the rest, zero-padded, bf16/f32."""
    n_layers = len(params)
    assert n_layers >= 2, "PolicyNet always has at least in_linear + out_linear"
    w0, b0 = params[0]
    n_obs, n0_out = w0.shape

    w_in = jnp.zeros((n_obs, dpad), jnp.bfloat16)
    w_in = w_in.at[:, :n0_out].set(w0.astype(jnp.bfloat16))

    n_rest = n_layers - 1
    w_rest = jnp.zeros((n_rest, dpad, dpad), jnp.bfloat16)
    b_stack = jnp.zeros((n_layers, 1, dpad), jnp.float32)
    b_stack = b_stack.at[0, 0, :n0_out].set(b0.reshape(-1).astype(jnp.float32))
    for i, (w, b) in enumerate(params[1:]):
        fi, fo = w.shape
        w_rest = w_rest.at[i, :fi, :fo].set(w.astype(jnp.bfloat16))
        b_stack = b_stack.at[i + 1, 0, :fo].set(b.reshape(-1).astype(jnp.float32))
    return w_in, w_rest, b_stack


def policy_net_forward(x, w_in, w_rest, b_stack, n_actions, *, max_tile=1024):
    """PolicyNet forward: returns [batch, n_actions] action probabilities (bf16)."""
    batch, n_obs = x.shape
    n_rest, dpad, _ = w_rest.shape
    n_layers = n_rest + 1

    # Generation-aware choices: 2 TensorCores on v7x, bf16 EUP on v6e/v7x only.
    kind = _device_kind()
    is_v7x = ("v7" in kind) or ("7x" in kind)
    n_cores = 2 if is_v7x else 1
    use_bf16_exp = is_v7x or ("v6" in kind)
    exp_dtype = jnp.bfloat16 if use_bf16_exp else jnp.float32

    # Batch tile: one grid step per TensorCore (grid=1 on v5e/v6e, 2 on v7x),
    # sublane-aligned, capped to bound vreg/VMEM pressure.
    tile = -(-batch // n_cores)
    tile = _round_up(max(tile, SUBLANE), SUBLANE)
    tile = min(tile, max_tile)
    batch_p = _round_up(batch, tile)

    x = x.astype(jnp.float32)
    if batch_p != batch:
        # Only the (narrow) batch axis is padded; no 128-lane feature pad.
        x = jnp.pad(x, ((0, batch_p - batch), (0, 0)))

    grid = (batch_p // tile,)
    kernel = functools.partial(policy_kernel, n_rest=n_rest,
                               n_actions=n_actions, exp_dtype=exp_dtype)

    # VMEM budget: double-buffered x/out tiles + resident params (default
    # double-buffered) + in-body f32 intermediates, with generous headroom.
    vmem_est = (2 * tile * n_obs * 4                      # x, 2 buffers, f32
                + 2 * tile * dpad * 2                     # out, 2 buffers, bf16
                + 2 * (n_obs * dpad * 2 + n_rest * dpad * dpad * 2)   # weights
                + 2 * n_layers * SUBLANE * dpad * 4       # biases (sublane-padded)
                + 12 * tile * dpad * 4)                   # intermediates / spills
    vmem_limit = int(min(max(2 * vmem_est, 16 << 20), 32 << 20))

    out_p = pl.pallas_call(
        kernel,
        out_shape=jax.ShapeDtypeStruct((batch_p, dpad), jnp.bfloat16),
        grid=grid,
        in_specs=[
            pl.BlockSpec((tile, n_obs), lambda i: (i, 0)),              # x tile (narrow K)
            pl.BlockSpec((n_obs, dpad), lambda i: (0, 0)),              # input-layer W (resident)
            pl.BlockSpec((n_rest, dpad, dpad), lambda i: (0, 0, 0)),    # rest weights (resident)
            pl.BlockSpec((n_layers, 1, dpad), lambda i: (0, 0, 0)),     # biases (resident)
        ],
        out_specs=pl.BlockSpec((tile, dpad), lambda i: (i, 0)),
        compiler_params=pltpu.CompilerParams(
            dimension_semantics=("parallel",),
            vmem_limit_bytes=vmem_limit,
        ),
    )(x, w_in, w_rest, b_stack)

    return out_p[:batch, :n_actions]


def init_params(key, n_obs, n_actions, n_hidden_layers, n_neurons):
    """Deterministic synthetic parameters matching PolicyNet's layer shapes."""
    dims = [n_obs] + [n_neurons] * n_hidden_layers + [n_actions]
    params = []
    for i in range(len(dims) - 1):
        key, kw, kb = jax.random.split(key, 3)
        fan_in, fan_out = dims[i], dims[i + 1]
        scale = 1.0 / jnp.sqrt(jnp.float32(fan_in))
        w = jax.random.normal(kw, (fan_in, fan_out), jnp.float32) * scale
        b = jax.random.normal(kb, (1, fan_out), jnp.float32) * 0.01
        params.append((w, b))
    return params


def reference_forward(x, params):
    """Pure-JAX reference mirroring the module (same bf16-storage precision)."""
    h = x.astype(jnp.float32)
    for i, (w, b) in enumerate(params):
        h = jnp.dot(h.astype(jnp.bfloat16), w.astype(jnp.bfloat16),
                    preferred_element_type=jnp.float32) + b.reshape(1, -1)
        if i < len(params) - 1:
            h = jnp.maximum(h, 0.0)
    return jax.nn.softmax(h, axis=1)


if __name__ == "__main__":
    # CartPole-like sizes: 4 observations, 2 actions, 32-wide hidden layers.
    # Batch of 512 amortizes launch overhead and exercises the batch grid.
    batch = 512
    n_obs = 4
    n_actions = 2
    n_hidden_layers = 2
    n_neurons = 32

    key = jax.random.PRNGKey(0)
    key, kx = jax.random.split(key)
    x = jax.random.normal(kx, (batch, n_obs), jnp.float32)
    params = init_params(key, n_obs, n_actions, n_hidden_layers, n_neurons)

    dpad = _round_up(max(n_neurons, n_actions), LANE)
    w_in, w_rest, b_stack = pack_params(params, dpad)

    probs = policy_net_forward(x, w_in, w_rest, b_stack, n_actions)
    probs = jax.block_until_ready(probs)

    ref = reference_forward(x, params)
    assert probs.shape == (batch, n_actions)
    # Tolerance covers bf16 weight storage, bf16 output, and (on v6e/v7x) the
    # bf16 exp epilogue; the reciprocal itself is exact.
    probs_f32 = probs.astype(jnp.float32)
    assert jnp.allclose(probs_f32, ref, atol=1e-2, rtol=1e-2), "mismatch vs reference"
    # Rows of a softmax sum to ~1 (bf16 output rounding only).
    assert jnp.allclose(jnp.sum(probs_f32, axis=1), 1.0, atol=1e-2)

    print("KERNEL_OK")
</pallas_src>

<mosaic_0001>
module attributes {stable_mosaic.version = 11 : i64} {
  func.func @policy_kernel(%arg0: i32, %arg1: memref<512x4xf32, #tpu.memory_space<vmem>>, %arg2: memref<4x128xbf16, #tpu.memory_space<vmem>>, %arg3: memref<2x128x128xbf16, #tpu.memory_space<vmem>>, %arg4: memref<3x1x128xf32, #tpu.memory_space<vmem>>, %arg5: memref<512x128xbf16, #tpu.memory_space<vmem>>) attributes {dimension_semantics = [#tpu.dimension_semantics<parallel>], iteration_bounds = array<i64: 1>, scalar_prefetch = 0 : i64, scratch_operands = 0 : i64, tpu.core_type = #tpu.core_type<tc>, window_params = [{transform_indices = @transform_0, window_bounds = array<i64: 512, 4>}, {pipeline_mode = #tpu.pipeline_mode<synchronous>, transform_indices = @transform_1, window_bounds = array<i64: 4, 128>}, {pipeline_mode = #tpu.pipeline_mode<synchronous>, transform_indices = @transform_2, window_bounds = array<i64: 2, 128, 128>}, {pipeline_mode = #tpu.pipeline_mode<synchronous>, transform_indices = @transform_3, window_bounds = array<i64: 3, 1, 128>}, {transform_indices = @transform_4, window_bounds = array<i64: 512, 128>}]} {
    %c0 = arith.constant 0 : index
    %c0_0 = arith.constant 0 : index
    %0 = vector.load %arg1[%c0, %c0_0] : memref<512x4xf32, #tpu.memory_space<vmem>>, vector<512x4xf32>
    %1 = arith.truncf %0 : vector<512x4xf32> to vector<512x4xbf16>
    %c0_1 = arith.constant 0 : index
    %c0_2 = arith.constant 0 : index
    %2 = vector.load %arg2[%c0_1, %c0_2] : memref<4x128xbf16, #tpu.memory_space<vmem>>, vector<4x128xbf16>
    %cst = arith.constant dense<0.000000e+00> : vector<512x128xf32>
    %3 = tpu.matmul %1, %2, %cst {dimension_numbers = #tpu.dot_dimension_numbers<[1], [0], [0], [1], [0, 0, 1, 1], [], []>} : vector<512x4xbf16>, vector<4x128xbf16>, vector<512x128xf32> -> vector<512x128xf32>
    %c0_3 = arith.constant 0 : index
    %c0_4 = arith.constant 0 : index
    %c0_5 = arith.constant 0 : index
    %4 = vector.load %arg4[%c0_3, %c0_4, %c0_5] : memref<3x1x128xf32, #tpu.memory_space<vmem>>, vector<1x1x128xf32>
    %5 = vector.shape_cast %4 : vector<1x1x128xf32> to vector<1x128xf32>
    %6 = vector.broadcast %5 : vector<1x128xf32> to vector<512x128xf32>
    %7 = arith.addf %3, %6 : vector<512x128xf32>
    %cst_6 = arith.constant 0.000000e+00 : f32
    %8 = vector.broadcast %cst_6 : f32 to vector<512x128xf32>
    %9 = arith.maximumf %7, %8 : vector<512x128xf32>
    %10 = arith.truncf %9 : vector<512x128xf32> to vector<512x128xbf16>
    %c0_7 = arith.constant 0 : index
    %c0_8 = arith.constant 0 : index
    %c0_9 = arith.constant 0 : index
    %11 = vector.load %arg3[%c0_7, %c0_8, %c0_9] : memref<2x128x128xbf16, #tpu.memory_space<vmem>>, vector<1x128x128xbf16>
    %12 = vector.shape_cast %11 : vector<1x128x128xbf16> to vector<128x128xbf16>
    %cst_10 = arith.constant dense<0.000000e+00> : vector<512x128xf32>
    %13 = tpu.matmul %10, %12, %cst_10 {dimension_numbers = #tpu.dot_dimension_numbers<[1], [0], [0], [1], [0, 0, 1, 1], [], []>} : vector<512x128xbf16>, vector<128x128xbf16>, vector<512x128xf32> -> vector<512x128xf32>
    %c1 = arith.constant 1 : index
    %c0_11 = arith.constant 0 : index
    %c0_12 = arith.constant 0 : index
    %14 = vector.load %arg4[%c1, %c0_11, %c0_12] : memref<3x1x128xf32, #tpu.memory_space<vmem>>, vector<1x1x128xf32>
    %15 = vector.shape_cast %14 : vector<1x1x128xf32> to vector<1x128xf32>
    %16 = vector.broadcast %15 : vector<1x128xf32> to vector<512x128xf32>
    %17 = arith.addf %13, %16 : vector<512x128xf32>
    %cst_13 = arith.constant 0.000000e+00 : f32
    %18 = vector.broadcast %cst_13 : f32 to vector<512x128xf32>
    %19 = arith.maximumf %17, %18 : vector<512x128xf32>
    %20 = arith.truncf %19 : vector<512x128xf32> to vector<512x128xbf16>
    %c1_14 = arith.constant 1 : index
    %c0_15 = arith.constant 0 : index
    %c0_16 = arith.constant 0 : index
    %21 = vector.load %arg3[%c1_14, %c0_15, %c0_16] : memref<2x128x128xbf16, #tpu.memory_space<vmem>>, vector<1x128x128xbf16>
    %22 = vector.shape_cast %21 : vector<1x128x128xbf16> to vector<128x128xbf16>
    %cst_17 = arith.constant dense<0.000000e+00> : vector<512x128xf32>
    %23 = tpu.matmul %20, %22, %cst_17 {dimension_numbers = #tpu.dot_dimension_numbers<[1], [0], [0], [1], [0, 0, 1, 1], [], []>} : vector<512x128xbf16>, vector<128x128xbf16>, vector<512x128xf32> -> vector<512x128xf32>
    %c2 = arith.constant 2 : index
    %c0_18 = arith.constant 0 : index
    %c0_19 = arith.constant 0 : index
    %24 = vector.load %arg4[%c2, %c0_18, %c0_19] : memref<3x1x128xf32, #tpu.memory_space<vmem>>, vector<1x1x128xf32>
    %25 = vector.shape_cast %24 : vector<1x1x128xf32> to vector<1x128xf32>
    %26 = vector.broadcast %25 : vector<1x128xf32> to vector<512x128xf32>
    %27 = arith.addf %23, %26 : vector<512x128xf32>
    %28 = tpu.iota {dimensions = array<i32: 1>} : vector<512x128xi32>
    %c2_i32 = arith.constant 2 : i32
    %29 = vector.broadcast %c2_i32 : i32 to vector<512x128xi32>
    %30 = arith.cmpi slt, %28, %29 : vector<512x128xi32>
    %cst_20 = arith.constant -1.000000e+30 : f32
    %31 = vector.broadcast %cst_20 : f32 to vector<512x128xf32>
    %32 = arith.select %30, %27, %31 : vector<512x128xi1>, vector<512x128xf32>
    %cst_21 = arith.constant dense<0xFF800000> : vector<512xf32>
    %33 = vector.multi_reduction <maximumf>, %32, %cst_21 [1] : vector<512x128xf32> to vector<512xf32>
    %34 = vector.shape_cast %33 : vector<512xf32> to vector<512x1xf32>
    %35 = vector.broadcast %34 : vector<512x1xf32> to vector<512x128xf32>
    %36 = arith.subf %32, %35 : vector<512x128xf32>
    %37 = math.exp %36 : vector<512x128xf32>
    %cst_22 = arith.constant dense<0.000000e+00> : vector<512xf32>
    %38 = vector.multi_reduction <add>, %37, %cst_22 [1] : vector<512x128xf32> to vector<512xf32>
    %39 = vector.shape_cast %38 : vector<512xf32> to vector<512x1xf32>
    %40 = tpu.reciprocal %39 : vector<512x1xf32> -> vector<512x1xf32>
    %41 = vector.broadcast %40 : vector<512x1xf32> to vector<512x128xf32>
    %42 = arith.mulf %37, %41 : vector<512x128xf32>
    %43 = arith.truncf %42 : vector<512x128xf32> to vector<512x128xbf16>
    %c0_23 = arith.constant 0 : index
    %c0_24 = arith.constant 0 : index
    %44 = vector.load %arg5[%c0_23, %c0_24] : memref<512x128xbf16, #tpu.memory_space<vmem>>, vector<512x128xbf16>
    tpu.vector_store %arg5[%c0_23, %c0_24], %43 {strides = array<i32>} : memref<512x128xbf16, #tpu.memory_space<vmem>>, vector<512x128xbf16>,
    return
  }
  func.func @transform_0(%arg0: i32) -> (i32, i32) {
    %c0_i32 = arith.constant 0 : i32
    %c0_i32_0 = arith.constant 0 : i32
    return %arg0, %c0_i32 : i32, i32
  }
  func.func @transform_1(%arg0: i32) -> (i32, i32) {
    %c0_i32 = arith.constant 0 : i32
    %c0_i32_0 = arith.constant 0 : i32
    %c0_i32_1 = arith.constant 0 : i32
    return %c0_i32, %c0_i32_0 : i32, i32
  }
  func.func @transform_2(%arg0: i32) -> (i32, i32, i32) {
    %c0_i32 = arith.constant 0 : i32
    %c0_i32_0 = arith.constant 0 : i32
    %c0_i32_1 = arith.constant 0 : i32
    %c0_i32_2 = arith.constant 0 : i32
    return %c0_i32, %c0_i32_0, %c0_i32_1 : i32, i32, i32
  }
  func.func @transform_3(%arg0: i32) -> (i32, i32, i32) {
    %c0_i32 = arith.constant 0 : i32
    %c0_i32_0 = arith.constant 0 : i32
    %c0_i32_1 = arith.constant 0 : i32
    %c0_i32_2 = arith.constant 0 : i32
    return %c0_i32, %c0_i32_0, %c0_i32_1 : i32, i32, i32
  }
  func.func @transform_4(%arg0: i32) -> (i32, i32) {
    %c0_i32 = arith.constant 0 : i32
    %c0_i32_0 = arith.constant 0 : i32
    return %arg0, %c0_i32 : i32, i32
  }
}

</mosaic_0001>

<llo_original>
// kernel: tpu_custom_call.1
$region0: #{tpu_custom_call.1}
  #allocation0 [shape = 'u32[]', space=smem, size = 0x4, offset = 0x4, fixed_abs, tag = 'smem constant byte address 0x4 - core index']
  #allocation1 [shape = 'u32[144,128]{1,0:T(1,128)}', space=vmem, size = 0x12000, scoped, tag = 'internal scratch']
  %s0 = inlined_call_operand.vmem [shape: f32[512,4], index: 0, kind: input, shape index: {}]
  %s1 = inlined_call_operand.vmem [shape: bf16[4,128], index: 1, kind: input, shape index: {}]
  %s2 = inlined_call_operand.vmem [shape: bf16[2,128,128], index: 2, kind: input, shape index: {}]
  %s3 = inlined_call_operand.vmem [shape: f32[3,1,128], index: 3, kind: input, shape index: {}]
  %s4 = inlined_call_operand.hbm [shape: bf16[512,128], index: 4, kind: output, shape index: {}]
  %s5 = sld [smem:[#allocation0]]
  $region26: #{tpu_custom_call.1} parent=0
    _
  %s7 = ssub.s32 1, %s5
  %s8 = scalar_select 0, %s7, %s5
  $region1: #{tpu_custom_call.1} parent=0
    #allocation2 [shape = 'u8[131072]{0}', space=vmem, size = 0x20000, scoped, tag = 'output window, operand 0, single buffered']
    #allocation3 [shape = 's32[1]{0}', space=sflag, size = 0x4, scoped, tag = 'scoped memory for tpu_custom_call.1']
    %9 = vsyncpa [#allocation3], 0
    // Predicated region
    $region2: #{tpu_custom_call.1} parent=1 // pred_check
      _
    $region3: #{tpu_custom_call.1} parent=1 // pred_check_branch
      %11 = sbr.rel (0) target = $region5
    $region4: #{tpu_custom_call.1} parent=1 // pred_region
      _
    $region5: #{tpu_custom_call.1} parent=1 // pred_fallthru
      _
    // Predicated region
    $region6: #{tpu_custom_call.1} parent=1 // pred_check
      _
    $region7: #{tpu_custom_call.1} parent=1 // pred_check_branch
      %13 = sbr.rel (0) target = $region9
    $region8: #{tpu_custom_call.1} parent=1 // pred_region
      _
    $region9: #{tpu_custom_call.1} parent=1 // pred_fallthru
      _
    // Predicated region
    $region10: #{tpu_custom_call.1} parent=1 // pred_check
      _
    $region11: #{tpu_custom_call.1} parent=1 // pred_check_branch
      %15 = sbr.rel (0) target = $region13
    $region12: #{tpu_custom_call.1} parent=1 // pred_region
      _
    $region13: #{tpu_custom_call.1} parent=1 // pred_fallthru
      _
    // Predicated region
    $region14: #{tpu_custom_call.1} parent=1 // pred_check
      _
    $region15: #{tpu_custom_call.1} parent=1 // pred_check_branch
      %17 = sbr.rel (0) target = $region17
    $region16: #{tpu_custom_call.1} parent=1 // pred_region
      _
    $region17: #{tpu_custom_call.1} parent=1 // pred_fallthru
      _
    %v19 = vld [vmem:[%s0] sm:$0xff]
    %v20 = vld [vmem:[%s0 + $0x8] sm:$0xff]
    %v21 = vld [vmem:[%s0 + $0x10] sm:$0xff]
    %v22 = vld [vmem:[%s0 + $0x18] sm:$0xff]
    %v23 = vld [vmem:[%s0 + $0x20] sm:$0xff]
    %v24 = vld [vmem:[%s0 + $0x28] sm:$0xff]
    %v25 = vld [vmem:[%s0 + $0x30] sm:$0xff]
    %v26 = vld [vmem:[%s0 + $0x38] sm:$0xff]
    %v27 = vld [vmem:[%s0 + $0x40] sm:$0xff]
    %v28 = vld [vmem:[%s0 + $0x48] sm:$0xff]
    %v29 = vld [vmem:[%s0 + $0x50] sm:$0xff]
    %v30 = vld [vmem:[%s0 + $0x58] sm:$0xff]
    %v31 = vld [vmem:[%s0 + $0x60] sm:$0xff]
    %v32 = vld [vmem:[%s0 + $0x68] sm:$0xff]
    %v33 = vld [vmem:[%s0 + $0x70] sm:$0xff]
    %v34 = vld [vmem:[%s0 + $0x78] sm:$0xff]
    %v35 = vld [vmem:[%s0 + $0x80] sm:$0xff]
    %v36 = vld [vmem:[%s0 + $0x88] sm:$0xff]
    %v37 = vld [vmem:[%s0 + $0x90] sm:$0xff]
    %v38 = vld [vmem:[%s0 + $0x98] sm:$0xff]
    %v39 = vld [vmem:[%s0 + $0xa0] sm:$0xff]
    %v40 = vld [vmem:[%s0 + $0xa8] sm:$0xff]
    %v41 = vld [vmem:[%s0 + $0xb0] sm:$0xff]
    %v42 = vld [vmem:[%s0 + $0xb8] sm:$0xff]
    %v43 = vld [vmem:[%s0 + $0xc0] sm:$0xff]
    %v44 = vld [vmem:[%s0 + $0xc8] sm:$0xff]
    %v45 = vld [vmem:[%s0 + $0xd0] sm:$0xff]
    %v46 = vld [vmem:[%s0 + $0xd8] sm:$0xff]
    %v47 = vld [vmem:[%s0 + $0xe0] sm:$0xff]
    %v48 = vld [vmem:[%s0 + $0xe8] sm:$0xff]
    %v49 = vld [vmem:[%s0 + $0xf0] sm:$0xff]
    %v50 = vld [vmem:[%s0 + $0xf8] sm:$0xff]
    %v51 = vld [vmem:[%s0 + $0x100] sm:$0xff]
    %v52 = vld [vmem:[%s0 + $0x108] sm:$0xff]
    %v53 = vld [vmem:[%s0 + $0x110] sm:$0xff]
    %v54 = vld [vmem:[%s0 + $0x118] sm:$0xff]
    %v55 = vld [vmem:[%s0 + $0x120] sm:$0xff]
    %v56 = vld [vmem:[%s0 + $0x128] sm:$0xff]
    %v57 = vld [vmem:[%s0 + $0x130] sm:$0xff]
    %v58 = vld [vmem:[%s0 + $0x138] sm:$0xff]
    %v59 = vld [vmem:[%s0 + $0x140] sm:$0xff]
    %v60 = vld [vmem:[%s0 + $0x148] sm:$0xff]
    %v61 = vld [vmem:[%s0 + $0x150] sm:$0xff]
    %v62 = vld [vmem:[%s0 + $0x158] sm:$0xff]
    %v63 = vld [vmem:[%s0 + $0x160] sm:$0xff]
    %v64 = vld [vmem:[%s0 + $0x168] sm:$0xff]
    %v65 = vld [vmem:[%s0 + $0x170] sm:$0xff]
    %v66 = vld [vmem:[%s0 + $0x178] sm:$0xff]
    %v67 = vld [vmem:[%s0 + $0x180] sm:$0xff]
    %v68 = vld [vmem:[%s0 + $0x188] sm:$0xff]
    %v69 = vld [vmem:[%s0 + $0x190] sm:$0xff]
    %v70 = vld [vmem:[%s0 + $0x198] sm:$0xff]
    %v71 = vld [vmem:[%s0 + $0x1a0] sm:$0xff]
    %v72 = vld [vmem:[%s0 + $0x1a8] sm:$0xff]
    %v73 = vld [vmem:[%s0 + $0x1b0] sm:$0xff]
    %v74 = vld [vmem:[%s0 + $0x1b8] sm:$0xff]
    %v75 = vld [vmem:[%s0 + $0x1c0] sm:$0xff]
    %v76 = vld [vmem:[%s0 + $0x1c8] sm:$0xff]
    %v77 = vld [vmem:[%s0 + $0x1d0] sm:$0xff]
    %v78 = vld [vmem:[%s0 + $0x1d8] sm:$0xff]
    %v79 = vld [vmem:[%s0 + $0x1e0] sm:$0xff]
    %v80 = vld [vmem:[%s0 + $0x1e8] sm:$0xff]
    %v81 = vld [vmem:[%s0 + $0x1f0] sm:$0xff]
    %v82 = vld [vmem:[%s0 + $0x1f8] sm:$0xff]
    %v83 = vpack.c.bf16 %v20, %v19
    %v84 = vpack.c.bf16 %v22, %v21
    %v85 = vpack.c.bf16 %v24, %v23
    %v86 = vpack.c.bf16 %v26, %v25
    %v87 = vpack.c.bf16 %v28, %v27
    %v88 = vpack.c.bf16 %v30, %v29
    %v89 = vpack.c.bf16 %v32, %v31
    %v90 = vpack.c.bf16 %v34, %v33
    %v91 = vpack.c.bf16 %v36, %v35
    %v92 = vpack.c.bf16 %v38, %v37
    %v93 = vpack.c.bf16 %v40, %v39
    %v94 = vpack.c.bf16 %v42, %v41
    %v95 = vpack.c.bf16 %v44, %v43
    %v96 = vpack.c.bf16 %v46, %v45
    %v97 = vpack.c.bf16 %v48, %v47
    %v98 = vpack.c.bf16 %v50, %v49
    %v99 = vpack.c.bf16 %v52, %v51
    %v100 = vpack.c.bf16 %v54, %v53
    %v101 = vpack.c.bf16 %v56, %v55
    %v102 = vpack.c.bf16 %v58, %v57
    %v103 = vpack.c.bf16 %v60, %v59
    %v104 = vpack.c.bf16 %v62, %v61
    %v105 = vpack.c.bf16 %v64, %v63
    %v106 = vpack.c.bf16 %v66, %v65
    %v107 = vpack.c.bf16 %v68, %v67
    %v108 = vpack.c.bf16 %v70, %v69
    %v109 = vpack.c.bf16 %v72, %v71
    %v110 = vpack.c.bf16 %v74, %v73
    %v111 = vpack.c.bf16 %v76, %v75
    %v112 = vpack.c.bf16 %v78, %v77
    %v113 = vpack.c.bf16 %v80, %v79
    %v114 = vpack.c.bf16 %v82, %v81
    %v115 = vld [vmem:[%s1] sm:$0x3]
    %v116 = vld [vmem:[%s3] sm:$0x1]
    %v118 = vlaneseq
    %v119 = vshrl.u32 %v118, 7
    %v120 = vsub.s32 0, %v119
    %v121 = vrot.slane %v116, %v120
    %vm123 = vcmask 31744
    %v125 = vsel %vm123, %v83, 0
    %v128 = vsel %vm123, %v84, 0
    %v131 = vsel %vm123, %v85, 0
    %v134 = vsel %vm123, %v86, 0
    %v137 = vsel %vm123, %v87, 0
    %v140 = vsel %vm123, %v88, 0
    %v143 = vsel %vm123, %v89, 0
    %v146 = vsel %vm123, %v90, 0
    %v149 = vsel %vm123, %v91, 0
    %v152 = vsel %vm123, %v92, 0
    %v155 = vsel %vm123, %v93, 0
    %v158 = vsel %vm123, %v94, 0
    %v161 = vsel %vm123, %v95, 0
    %v164 = vsel %vm123, %v96, 0
    %v167 = vsel %vm123, %v97, 0
    %v170 = vsel %vm123, %v98, 0
    %v173 = vsel %vm123, %v99, 0
    %v176 = vsel %vm123, %v100, 0
    %v179 = vsel %vm123, %v101, 0
    %v182 = vsel %vm123, %v102, 0
    %v185 = vsel %vm123, %v103, 0
    %v188 = vsel %vm123, %v104, 0
    %v191 = vsel %vm123, %v105, 0
    %v194 = vsel %vm123, %v106, 0
    %v197 = vsel %vm123, %v107, 0
    %v200 = vsel %vm123, %v108, 0
    %v203 = vsel %vm123, %v109, 0
    %v206 = vsel %vm123, %v110, 0
    %v209 = vsel %vm123, %v111, 0
    %v212 = vsel %vm123, %v112, 0
    %v215 = vsel %vm123, %v113, 0
    %v218 = vsel %vm123, %v114, 0
    %vm220 = vcmask 1041408
    %v222 = vsel %vm220, %v115, 0
    %224 = vmatprep.subr.bf16.mxu0 0
    %225 = vmatpush1.bf16.msra.mxu0 0
    %226 = vmatprep.subr.bf16.mxu0 0
    %227 = vmatpush1.bf16.msra.mxu0 0
    %228 = vmatprep.subr.bf16.mxu0 0
    %229 = vmatpush1.bf16.msra.mxu0 0
    %230 = vmatprep.subr.bf16.mxu0 0
    %231 = vmatpush1.bf16.msra.mxu0 0
    %232 = vmatprep.subr.bf16.mxu0 0
    %233 = vmatpush1.bf16.msra.mxu0 0
    %234 = vmatprep.subr.bf16.mxu0 0
    %235 = vmatpush1.bf16.msra.mxu0 0
    %236 = vmatprep.subr.bf16.mxu0 0
    %237 = vmatpush1.bf16.msra.mxu0 0
    %238 = vmatprep.subr.bf16.mxu0 0
    %239 = vmatpush1.bf16.msra.mxu0 %v222
    %240 = vmatprep.subr.bf16.mxu0 0
    %241 = vmatpush2.bf16.msra.mxu0 0
    %242 = vmatprep.subr.bf16.mxu0 0
    %243 = vmatpush2.bf16.msra.mxu0 0
    %244 = vmatprep.subr.bf16.mxu0 0
    %245 = vmatpush2.bf16.msra.mxu0 0
    %246 = vmatprep.subr.bf16.mxu0 0
    %247 = vmatpush2.bf16.msra.mxu0 0
    %248 = vmatprep.subr.bf16.mxu0 0
    %249 = vmatpush2.bf16.msra.mxu0 0
    %250 = vmatprep.subr.bf16.mxu0 0
    %251 = vmatpush2.bf16.msra.mxu0 0
    %252 = vmatprep.subr.bf16.mxu0 0
    %253 = vmatpush2.bf16.msra.mxu0 0
    %254 = vmatprep.subr.bf16.mxu0 0
    %255 = vmatpush2.bf16.msra.mxu0 0
    %256 = vmatprep.mubr.bf16.mxu0 0
    %257 = vmatmul.mubr.bf16.gmra.mxu0 %v125
    %v258 = vpop.f32.mrf.mxu0
    %v259 = vadd.f32 %v121, %v258
    %v260 = vpop.f32.mrf.mxu0
    %v261 = vpop.f32.mrf.mxu0
    %v262 = vadd.f32 %v121, %v261
    %v263 = vpop.f32.mrf.mxu0
    %264 = vmatprep.mubr.bf16.mxu0 0
    %265 = vmatmul.mubr.bf16.gmra.mxu0 %v128
    %v266 = vpop.f32.mrf.mxu0
    %v267 = vadd.f32 %v121, %v266
    %v268 = vpop.f32.mrf.mxu0
    %v269 = vpop.f32.mrf.mxu0
    %v270 = vadd.f32 %v121, %v269
    %v271 = vpop.f32.mrf.mxu0
    %272 = vmatprep.mubr.bf16.mxu0 0
    %273 = vmatmul.mubr.bf16.gmra.mxu0 %v131
    %v274 = vpop.f32.mrf.mxu0
    %v275 = vadd.f32 %v121, %v274
    %v276 = vpop.f32.mrf.mxu0
    %v277 = vpop.f32.mrf.mxu0
    %v278 = vadd.f32 %v121, %v277
    %v279 = vpop.f32.mrf.mxu0
    %280 = vmatprep.mubr.bf16.mxu0 0
    %281 = vmatmul.mubr.bf16.gmra.mxu0 %v134
    %v282 = vpop.f32.mrf.mxu0
    %v283 = vadd.f32 %v121, %v282
    %v284 = vpop.f32.mrf.mxu0
    %v285 = vpop.f32.mrf.mxu0
    %v286 = vadd.f32 %v121, %v285
    %v287 = vpop.f32.mrf.mxu0
    %288 = vmatprep.mubr.bf16.mxu0 0
    %289 = vmatmul.mubr.bf16.gmra.mxu0 %v137
    %v290 = vpop.f32.mrf.mxu0
    %v291 = vadd.f32 %v121, %v290
    %v292 = vpop.f32.mrf.mxu0
    %v293 = vpop.f32.mrf.mxu0
    %v294 = vadd.f32 %v121, %v293
    %v295 = vpop.f32.mrf.mxu0
    %296 = vmatprep.mubr.bf16.mxu0 0
    %297 = vmatmul.mubr.bf16.gmra.mxu0 %v140
    %v298 = vpop.f32.mrf.mxu0
    %v299 = vadd.f32 %v121, %v298
    %v300 = vpop.f32.mrf.mxu0
    %v301 = vpop.f32.mrf.mxu0
    %v302 = vadd.f32 %v121, %v301
    %v303 = vpop.f32.mrf.mxu0
    %304 = vmatprep.mubr.bf16.mxu0 0
    %305 = vmatmul.mubr.bf16.gmra.mxu0 %v143
    %v306 = vpop.f32.mrf.mxu0
    %v307 = vadd.f32 %v121, %v306
    %v308 = vpop.f32.mrf.mxu0
    %v309 = vpop.f32.mrf.mxu0
    %v310 = vadd.f32 %v121, %v309
    %v311 = vpop.f32.mrf.mxu0
    %312 = vmatprep.mubr.bf16.mxu0 0
    %313 = vmatmul.mubr.bf16.gmra.mxu0 %v146
    %v314 = vpop.f32.mrf.mxu0
    %v315 = vadd.f32 %v121, %v314
    %v316 = vpop.f32.mrf.mxu0
    %v317 = vpop.f32.mrf.mxu0
    %v318 = vadd.f32 %v121, %v317
    %v319 = vpop.f32.mrf.mxu0
    %320 = vmatprep.mubr.bf16.mxu0 0
    %321 = vmatmul.mubr.bf16.gmra.mxu0 %v149
    %v322 = vpop.f32.mrf.mxu0
    %v323 = vadd.f32 %v121, %v322
    %v324 = vpop.f32.mrf.mxu0
    %v325 = vpop.f32.mrf.mxu0
    %v326 = vadd.f32 %v121, %v325
    %v327 = vpop.f32.mrf.mxu0
    %328 = vmatprep.mubr.bf16.mxu0 0
    %329 = vmatmul.mubr.bf16.gmra.mxu0 %v152
    %v330 = vpop.f32.mrf.mxu0
    %v331 = vadd.f32 %v121, %v330
    %v332 = vpop.f32.mrf.mxu0
    %v333 = vpop.f32.mrf.mxu0
    %v334 = vadd.f32 %v121, %v333
    %v335 = vpop.f32.mrf.mxu0
    %336 = vmatprep.mubr.bf16.mxu0 0
    %337 = vmatmul.mubr.bf16.gmra.mxu0 %v155
    %v338 = vpop.f32.mrf.mxu0
    %v339 = vadd.f32 %v121, %v338
    %v340 = vpop.f32.mrf.mxu0
    %v341 = vpop.f32.mrf.mxu0
    %v342 = vadd.f32 %v121, %v341
    %v343 = vpop.f32.mrf.mxu0
    %344 = vmatprep.mubr.bf16.mxu0 0
    %345 = vmatmul.mubr.bf16.gmra.mxu0 %v158
    %v346 = vpop.f32.mrf.mxu0
    %v347 = vadd.f32 %v121, %v346
    %v348 = vpop.f32.mrf.mxu0
    %v349 = vpop.f32.mrf.mxu0
    %v350 = vadd.f32 %v121, %v349
    %v351 = vpop.f32.mrf.mxu0
    %352 = vmatprep.mubr.bf16.mxu0 0
    %353 = vmatmul.mubr.bf16.gmra.mxu0 %v161
    %v354 = vpop.f32.mrf.mxu0
    %v355 = vadd.f32 %v121, %v354
    %v356 = vpop.f32.mrf.mxu0
    %v357 = vpop.f32.mrf.mxu0
    %v358 = vadd.f32 %v121, %v357
    %v359 = vpop.f32.mrf.mxu0
    %360 = vmatprep.mubr.bf16.mxu0 0
    %361 = vmatmul.mubr.bf16.gmra.mxu0 %v164
    %v362 = vpop.f32.mrf.mxu0
    %v363 = vadd.f32 %v121, %v362
    %v364 = vpop.f32.mrf.mxu0
    %v365 = vpop.f32.mrf.mxu0
    %v366 = vadd.f32 %v121, %v365
    %v367 = vpop.f32.mrf.mxu0
    %368 = vmatprep.mubr.bf16.mxu0 0
    %369 = vmatmul.mubr.bf16.gmra.mxu0 %v167
    %v370 = vpop.f32.mrf.mxu0
    %v371 = vadd.f32 %v121, %v370
    %v372 = vpop.f32.mrf.mxu0
    %v373 = vpop.f32.mrf.mxu0
    %v374 = vadd.f32 %v121, %v373
    %v375 = vpop.f32.mrf.mxu0
    %376 = vmatprep.mubr.bf16.mxu0 0
    %377 = vmatmul.mubr.bf16.gmra.mxu0 %v170
    %v378 = vpop.f32.mrf.mxu0
    %v379 = vadd.f32 %v121, %v378
    %v380 = vpop.f32.mrf.mxu0
    %v381 = vpop.f32.mrf.mxu0
    %v382 = vadd.f32 %v121, %v381
    %v383 = vpop.f32.mrf.mxu0
    %384 = vmatprep.mubr.bf16.mxu0 0
    %385 = vmatmul.mubr.bf16.gmra.mxu0 %v173
    %v386 = vpop.f32.mrf.mxu0
    %v387 = vadd.f32 %v121, %v386
    %v388 = vpop.f32.mrf.mxu0
    %v389 = vpop.f32.mrf.mxu0
    %v390 = vadd.f32 %v121, %v389
    %v391 = vpop.f32.mrf.mxu0
    %392 = vmatprep.mubr.bf16.mxu0 0
    %393 = vmatmul.mubr.bf16.gmra.mxu0 %v176
    %v394 = vpop.f32.mrf.mxu0
    %v395 = vadd.f32 %v121, %v394
    %v396 = vpop.f32.mrf.mxu0
    %v397 = vpop.f32.mrf.mxu0
    %v398 = vadd.f32 %v121, %v397
    %v399 = vpop.f32.mrf.mxu0
    %400 = vmatprep.mubr.bf16.mxu0 0
    %401 = vmatmul.mubr.bf16.gmra.mxu0 %v179
    %v402 = vpop.f32.mrf.mxu0
    %v403 = vadd.f32 %v121, %v402
    %v404 = vpop.f32.mrf.mxu0
    %v405 = vpop.f32.mrf.mxu0
    %v406 = vadd.f32 %v121, %v405
    %v407 = vpop.f32.mrf.mxu0
    %408 = vmatprep.mubr.bf16.mxu0 0
    %409 = vmatmul.mubr.bf16.gmra.mxu0 %v182
    %v410 = vpop.f32.mrf.mxu0
    %v411 = vadd.f32 %v121, %v410
    %v412 = vpop.f32.mrf.mxu0
    %v413 = vpop.f32.mrf.mxu0
    %v414 = vadd.f32 %v121, %v413
    %v415 = vpop.f32.mrf.mxu0
    %416 = vmatprep.mubr.bf16.mxu0 0
    %417 = vmatmul.mubr.bf16.gmra.mxu0 %v185
    %v418 = vpop.f32.mrf.mxu0
    %v419 = vadd.f32 %v121, %v418
    %v420 = vpop.f32.mrf.mxu0
    %v421 = vpop.f32.mrf.mxu0
    %v422 = vadd.f32 %v121, %v421
    %v423 = vpop.f32.mrf.mxu0
    %424 = vmatprep.mubr.bf16.mxu0 0
    %425 = vmatmul.mubr.bf16.gmra.mxu0 %v188
    %v426 = vpop.f32.mrf.mxu0
    %v427 = vadd.f32 %v121, %v426
    %v428 = vpop.f32.mrf.mxu0
    %v429 = vpop.f32.mrf.mxu0
    %v430 = vadd.f32 %v121, %v429
    %v431 = vpop.f32.mrf.mxu0
    %432 = vmatprep.mubr.bf16.mxu0 0
    %433 = vmatmul.mubr.bf16.gmra.mxu0 %v191
    %v434 = vpop.f32.mrf.mxu0
    %v435 = vadd.f32 %v121, %v434
    %v436 = vpop.f32.mrf.mxu0
    %v437 = vpop.f32.mrf.mxu0
    %v438 = vadd.f32 %v121, %v437
    %v439 = vpop.f32.mrf.mxu0
    %440 = vmatprep.mubr.bf16.mxu0 0
    %441 = vmatmul.mubr.bf16.gmra.mxu0 %v194
    %v442 = vpop.f32.mrf.mxu0
    %v443 = vadd.f32 %v121, %v442
    %v444 = vpop.f32.mrf.mxu0
    %v445 = vpop.f32.mrf.mxu0
    %v446 = vadd.f32 %v121, %v445
    %v447 = vpop.f32.mrf.mxu0
    %448 = vmatprep.mubr.bf16.mxu0 0
    %449 = vmatmul.mubr.bf16.gmra.mxu0 %v197
    %v450 = vpop.f32.mrf.mxu0
    %v451 = vadd.f32 %v121, %v450
    %v452 = vpop.f32.mrf.mxu0
    %v453 = vpop.f32.mrf.mxu0
    %v454 = vadd.f32 %v121, %v453
    %v455 = vpop.f32.mrf.mxu0
    %456 = vmatprep.mubr.bf16.mxu0 0
    %457 = vmatmul.mubr.bf16.gmra.mxu0 %v200
    %v458 = vpop.f32.mrf.mxu0
    %v459 = vadd.f32 %v121, %v458
    %v460 = vpop.f32.mrf.mxu0
    %v461 = vpop.f32.mrf.mxu0
    %v462 = vadd.f32 %v121, %v461
    %v463 = vpop.f32.mrf.mxu0
    %464 = vmatprep.mubr.bf16.mxu0 0
    %465 = vmatmul.mubr.bf16.gmra.mxu0 %v203
    %v466 = vpop.f32.mrf.mxu0
    %v467 = vadd.f32 %v121, %v466
    %v468 = vpop.f32.mrf.mxu0
    %v469 = vpop.f32.mrf.mxu0
    %v470 = vadd.f32 %v121, %v469
    %v471 = vpop.f32.mrf.mxu0
    %472 = vmatprep.mubr.bf16.mxu0 0
    %473 = vmatmul.mubr.bf16.gmra.mxu0 %v206
    %v474 = vpop.f32.mrf.mxu0
    %v475 = vadd.f32 %v121, %v474
    %v476 = vpop.f32.mrf.mxu0
    %v477 = vpop.f32.mrf.mxu0
    %v478 = vadd.f32 %v121, %v477
    %v479 = vpop.f32.mrf.mxu0
    %480 = vmatprep.mubr.bf16.mxu0 0
    %481 = vmatmul.mubr.bf16.gmra.mxu0 %v209
    %v482 = vpop.f32.mrf.mxu0
    %v483 = vadd.f32 %v121, %v482
    %v484 = vpop.f32.mrf.mxu0
    %v485 = vpop.f32.mrf.mxu0
    %v486 = vadd.f32 %v121, %v485
    %v487 = vpop.f32.mrf.mxu0
    %488 = vmatprep.mubr.bf16.mxu0 0
    %489 = vmatmul.mubr.bf16.gmra.mxu0 %v212
    %v490 = vpop.f32.mrf.mxu0
    %v491 = vadd.f32 %v121, %v490
    %v492 = vpop.f32.mrf.mxu0
    %v493 = vpop.f32.mrf.mxu0
    %v494 = vadd.f32 %v121, %v493
    %v495 = vpop.f32.mrf.mxu0
    %496 = vmatprep.mubr.bf16.mxu0 0
    %497 = vmatmul.mubr.bf16.gmra.mxu0 %v215
    %v498 = vpop.f32.mrf.mxu0
    %v499 = vadd.f32 %v121, %v498
    %v500 = vpop.f32.mrf.mxu0
    %v501 = vpop.f32.mrf.mxu0
    %v502 = vadd.f32 %v121, %v501
    %v503 = vpop.f32.mrf.mxu0
    %504 = vmatprep.mubr.bf16.mxu0 0
    %505 = vmatmul.mubr.bf16.gmra.mxu0 %v218
    %v506 = vpop.f32.mrf.mxu0
    %v507 = vadd.f32 %v121, %v506
    %v508 = vpop.f32.mrf.mxu0
    %v509 = vpop.f32.mrf.mxu0
    %v510 = vadd.f32 %v121, %v509
    %v511 = vpop.f32.mrf.mxu0
    %512 = vdwg.mxu0
    %v513 = vmax.f32 %v259, 0.0
    %v514 = vmax.f32 %v262, 0.0
    %v515 = vmax.f32 %v267, 0.0
    %v516 = vmax.f32 %v270, 0.0
    %v517 = vmax.f32 %v275, 0.0
    %v518 = vmax.f32 %v278, 0.0
    %v519 = vmax.f32 %v283, 0.0
    %v520 = vmax.f32 %v286, 0.0
    %v521 = vmax.f32 %v291, 0.0
    %v522 = vmax.f32 %v294, 0.0
    %v523 = vmax.f32 %v299, 0.0
    %v524 = vmax.f32 %v302, 0.0
    %v525 = vmax.f32 %v307, 0.0
    %v526 = vmax.f32 %v310, 0.0
    %v527 = vmax.f32 %v315, 0.0
    %v528 = vmax.f32 %v318, 0.0
    %v529 = vmax.f32 %v323, 0.0
    %v530 = vmax.f32 %v326, 0.0
    %v531 = vmax.f32 %v331, 0.0
    %v532 = vmax.f32 %v334, 0.0
    %v533 = vmax.f32 %v339, 0.0
    %v534 = vmax.f32 %v342, 0.0
    %v535 = vmax.f32 %v347, 0.0
    %v536 = vmax.f32 %v350, 0.0
    %v537 = vmax.f32 %v355, 0.0
    %v538 = vmax.f32 %v358, 0.0
    %v539 = vmax.f32 %v363, 0.0
    %v540 = vmax.f32 %v366, 0.0
    %v541 = vmax.f32 %v371, 0.0
    %v542 = vmax.f32 %v374, 0.0
    %v543 = vmax.f32 %v379, 0.0
    %v544 = vmax.f32 %v382, 0.0
    %v545 = vmax.f32 %v387, 0.0
    %v546 = vmax.f32 %v390, 0.0
    %v547 = vmax.f32 %v395, 0.0
    %v548 = vmax.f32 %v398, 0.0
    %v549 = vmax.f32 %v403, 0.0
    %v550 = vmax.f32 %v406, 0.0
    %v551 = vmax.f32 %v411, 0.0
    %v552 = vmax.f32 %v414, 0.0
    %v553 = vmax.f32 %v419, 0.0
    %v554 = vmax.f32 %v422, 0.0
    %v555 = vmax.f32 %v427, 0.0
    %v556 = vmax.f32 %v430, 0.0
    %v557 = vmax.f32 %v435, 0.0
    %v558 = vmax.f32 %v438, 0.0
    %v559 = vmax.f32 %v443, 0.0
    %v560 = vmax.f32 %v446, 0.0
    %v561 = vmax.f32 %v451, 0.0
    %v562 = vmax.f32 %v454, 0.0
    %v563 = vmax.f32 %v459, 0.0
    %v564 = vmax.f32 %v462, 0.0
    %v565 = vmax.f32 %v467, 0.0
    %v566 = vmax.f32 %v470, 0.0
    %v567 = vmax.f32 %v475, 0.0
    %v568 = vmax.f32 %v478, 0.0
    %v569 = vmax.f32 %v483, 0.0
    %v570 = vmax.f32 %v486, 0.0
    %v571 = vmax.f32 %v491, 0.0
    %v572 = vmax.f32 %v494, 0.0
    %v573 = vmax.f32 %v499, 0.0
    %v574 = vmax.f32 %v502, 0.0
    %v575 = vmax.f32 %v507, 0.0
    %v576 = vmax.f32 %v510, 0.0
    %v577 = vpack.c.bf16 %v514, %v513
    %v578 = vpack.c.bf16 %v516, %v515
    %v579 = vpack.c.bf16 %v518, %v517
    %v580 = vpack.c.bf16 %v520, %v519
    %v581 = vpack.c.bf16 %v522, %v521
    %v582 = vpack.c.bf16 %v524, %v523
    %v583 = vpack.c.bf16 %v526, %v525
    %v584 = vpack.c.bf16 %v528, %v527
    %v585 = vpack.c.bf16 %v530, %v529
    %v586 = vpack.c.bf16 %v532, %v531
    %v587 = vpack.c.bf16 %v534, %v533
    %v588 = vpack.c.bf16 %v536, %v535
    %v589 = vpack.c.bf16 %v538, %v537
    %v590 = vpack.c.bf16 %v540, %v539
    %v591 = vpack.c.bf16 %v542, %v541
    %v592 = vpack.c.bf16 %v544, %v543
    %v593 = vpack.c.bf16 %v546, %v545
    %v594 = vpack.c.bf16 %v548, %v547
    %v595 = vpack.c.bf16 %v550, %v549
    %v596 = vpack.c.bf16 %v552, %v551
    %v597 = vpack.c.bf16 %v554, %v553
    %v598 = vpack.c.bf16 %v556, %v555
    %v599 = vpack.c.bf16 %v558, %v557
    %v600 = vpack.c.bf16 %v560, %v559
    %v601 = vpack.c.bf16 %v562, %v561
    %v602 = vpack.c.bf16 %v564, %v563
    %v603 = vpack.c.bf16 %v566, %v565
    %v604 = vpack.c.bf16 %v568, %v567
    %v605 = vpack.c.bf16 %v570, %v569
    %v606 = vpack.c.bf16 %v572, %v571
    %v607 = vpack.c.bf16 %v574, %v573
    %v608 = vpack.c.bf16 %v576, %v575
    %v609 = vld [vmem:[%s2] sm:$0xf]
    %v610 = vld [vmem:[%s2 + $0x4] sm:$0xf]
    %v611 = vld [vmem:[%s2 + $0x8] sm:$0xf]
    %v612 = vld [vmem:[%s2 + $0xc] sm:$0xf]
    %v613 = vld [vmem:[%s2 + $0x10] sm:$0xf]
    %v614 = vld [vmem:[%s2 + $0x14] sm:$0xf]
    %v615 = vld [vmem:[%s2 + $0x18] sm:$0xf]
    %v616 = vld [vmem:[%s2 + $0x1c] sm:$0xf]
    %v617 = vld [vmem:[%s2 + $0x20] sm:$0xf]
    %v618 = vld [vmem:[%s2 + $0x24] sm:$0xf]
    %v619 = vld [vmem:[%s2 + $0x28] sm:$0xf]
    %v620 = vld [vmem:[%s2 + $0x2c] sm:$0xf]
    %v621 = vld [vmem:[%s2 + $0x30] sm:$0xf]
    %v622 = vld [vmem:[%s2 + $0x34] sm:$0xf]
    %v623 = vld [vmem:[%s2 + $0x38] sm:$0xf]
    %v624 = vld [vmem:[%s2 + $0x3c] sm:$0xf]
    %s625 = scalar_lea.vmem %s3, 1
    %v626 = vld [vmem:[%s625] sm:$0x1]
    %v628 = vlaneseq
    %v629 = vshrl.u32 %v628, 7
    %v630 = vsub.s32 0, %v629
    %v631 = vrot.slane %v626, %v630
    %v649 = vunpack.c.l.b16 %v609
    %v650 = vunpack.c.l.b16 %v610
    %v651 = vunpack.c.l.b16 %v611
    %v652 = vunpack.c.l.b16 %v612
    %v653 = vunpack.c.l.b16 %v613
    %v654 = vunpack.c.l.b16 %v614
    %v655 = vunpack.c.l.b16 %v615
    %v656 = vunpack.c.l.b16 %v616
    %v657 = vunpack.c.l.b16 %v617
    %v658 = vunpack.c.l.b16 %v618
    %v659 = vunpack.c.l.b16 %v619
    %v660 = vunpack.c.l.b16 %v620
    %v661 = vunpack.c.l.b16 %v621
    %v662 = vunpack.c.l.b16 %v622
    %v663 = vunpack.c.l.b16 %v623
    %v664 = vunpack.c.l.b16 %v624
    %v665 = vpack.c.b16 %v650, %v649
    %v666 = vpack.c.b16 %v652, %v651
    %v667 = vpack.c.b16 %v654, %v653
    %v668 = vpack.c.b16 %v656, %v655
    %v669 = vpack.c.b16 %v658, %v657
    %v670 = vpack.c.b16 %v660, %v659
    %v671 = vpack.c.b16 %v662, %v661
    %v672 = vpack.c.b16 %v664, %v663
    %681 = vmatprep.subr.bf16.mxu0 0
    %682 = vmatpush1.bf16.msra.mxu0 %v672
    %683 = vmatprep.subr.bf16.mxu0 0
    %684 = vmatpush1.bf16.msra.mxu0 %v671
    %685 = vmatprep.subr.bf16.mxu0 0
    %686 = vmatpush1.bf16.msra.mxu0 %v670
    %687 = vmatprep.subr.bf16.mxu0 0
    %688 = vmatpush1.bf16.msra.mxu0 %v669
    %689 = vmatprep.subr.bf16.mxu0 0
    %690 = vmatpush1.bf16.msra.mxu0 %v668
    %691 = vmatprep.subr.bf16.mxu0 0
    %692 = vmatpush1.bf16.msra.mxu0 %v667
    %693 = vmatprep.subr.bf16.mxu0 0
    %694 = vmatpush1.bf16.msra.mxu0 %v666
    %695 = vmatprep.subr.bf16.mxu0 0
    %696 = vmatpush1.bf16.msra.mxu0 %v665
    %697 = vmatprep.subr.bf16.mxu0 0
    %698 = vmatpush2.bf16.msra.mxu0 0
    %699 = vmatprep.subr.bf16.mxu0 0
    %700 = vmatpush2.bf16.msra.mxu0 0
    %701 = vmatprep.subr.bf16.mxu0 0
    %702 = vmatpush2.bf16.msra.mxu0 0
    %703 = vmatprep.subr.bf16.mxu0 0
    %704 = vmatpush2.bf16.msra.mxu0 0
    %705 = vmatprep.subr.bf16.mxu0 0
    %706 = vmatpush2.bf16.msra.mxu0 0
    %707 = vmatprep.subr.bf16.mxu0 0
    %708 = vmatpush2.bf16.msra.mxu0 0
    %709 = vmatprep.subr.bf16.mxu0 0
    %710 = vmatpush2.bf16.msra.mxu0 0
    %711 = vmatprep.subr.bf16.mxu0 0
    %712 = vmatpush2.bf16.msra.mxu0 0
    %713 = vmatprep.mubr.bf16.mxu0 0
    %714 = vmatmul.mubr.bf16.gmra.mxu0 %v577
    %v715 = vpop.f32.mrf.mxu0
    %v716 = vadd.f32 %v631, %v715
    %v717 = vpop.f32.mrf.mxu0
    %v718 = vpop.f32.mrf.mxu0
    %v719 = vadd.f32 %v631, %v718
    %v720 = vpop.f32.mrf.mxu0
    %721 = vmatprep.mubr.bf16.mxu0 0
    %722 = vmatmul.mubr.bf16.gmra.mxu0 %v578
    %v723 = vpop.f32.mrf.mxu0
    %v724 = vadd.f32 %v631, %v723
    %v725 = vpop.f32.mrf.mxu0
    %v726 = vpop.f32.mrf.mxu0
    %v727 = vadd.f32 %v631, %v726
    %v728 = vpop.f32.mrf.mxu0
    %729 = vmatprep.mubr.bf16.mxu0 0
    %730 = vmatmul.mubr.bf16.gmra.mxu0 %v579
    %v731 = vpop.f32.mrf.mxu0
    %v732 = vadd.f32 %v631, %v731
    %v733 = vpop.f32.mrf.mxu0
    %v734 = vpop.f32.mrf.mxu0
    %v735 = vadd.f32 %v631, %v734
    %v736 = vpop.f32.mrf.mxu0
    %737 = vmatprep.mubr.bf16.mxu0 0
    %738 = vmatmul.mubr.bf16.gmra.mxu0 %v580
    %v739 = vpop.f32.mrf.mxu0
    %v740 = vadd.f32 %v631, %v739
    %v741 = vpop.f32.mrf.mxu0
    %v742 = vpop.f32.mrf.mxu0
    %v743 = vadd.f32 %v631, %v742
    %v744 = vpop.f32.mrf.mxu0
    %745 = vmatprep.mubr.bf16.mxu0 0
    %746 = vmatmul.mubr.bf16.gmra.mxu0 %v581
    %v747 = vpop.f32.mrf.mxu0
    %v748 = vadd.f32 %v631, %v747
    %v749 = vpop.f32.mrf.mxu0
    %v750 = vpop.f32.mrf.mxu0
    %v751 = vadd.f32 %v631, %v750
    %v752 = vpop.f32.mrf.mxu0
    %753 = vmatprep.mubr.bf16.mxu0 0
    %754 = vmatmul.mubr.bf16.gmra.mxu0 %v582
    %v755 = vpop.f32.mrf.mxu0
    %v756 = vadd.f32 %v631, %v755
    %v757 = vpop.f32.mrf.mxu0
    %v758 = vpop.f32.mrf.mxu0
    %v759 = vadd.f32 %v631, %v758
    %v760 = vpop.f32.mrf.mxu0
    %761 = vmatprep.mubr.bf16.mxu0 0
    %762 = vmatmul.mubr.bf16.gmra.mxu0 %v583
    %v763 = vpop.f32.mrf.mxu0
    %v764 = vadd.f32 %v631, %v763
    %v765 = vpop.f32.mrf.mxu0
    %v766 = vpop.f32.mrf.mxu0
    %v767 = vadd.f32 %v631, %v766
    %v768 = vpop.f32.mrf.mxu0
    %769 = vmatprep.mubr.bf16.mxu0 0
    %770 = vmatmul.mubr.bf16.gmra.mxu0 %v584
    %v771 = vpop.f32.mrf.mxu0
    %v772 = vadd.f32 %v631, %v771
    %v773 = vpop.f32.mrf.mxu0
    %v774 = vpop.f32.mrf.mxu0
    %v775 = vadd.f32 %v631, %v774
    %v776 = vpop.f32.mrf.mxu0
    %777 = vmatprep.mubr.bf16.mxu0 0
    %778 = vmatmul.mubr.bf16.gmra.mxu0 %v585
    %v779 = vpop.f32.mrf.mxu0
    %v780 = vadd.f32 %v631, %v779
    %v781 = vpop.f32.mrf.mxu0
    %v782 = vpop.f32.mrf.mxu0
    %v783 = vadd.f32 %v631, %v782
    %v784 = vpop.f32.mrf.mxu0
    %785 = vmatprep.mubr.bf16.mxu0 0
    %786 = vmatmul.mubr.bf16.gmra.mxu0 %v586
    %v787 = vpop.f32.mrf.mxu0
    %v788 = vadd.f32 %v631, %v787
    %v789 = vpop.f32.mrf.mxu0
    %v790 = vpop.f32.mrf.mxu0
    %v791 = vadd.f32 %v631, %v790
    %v792 = vpop.f32.mrf.mxu0
    %793 = vmatprep.mubr.bf16.mxu0 0
    %794 = vmatmul.mubr.bf16.gmra.mxu0 %v587
    %v795 = vpop.f32.mrf.mxu0
    %v796 = vadd.f32 %v631, %v795
    %v797 = vpop.f32.mrf.mxu0
    %v798 = vpop.f32.mrf.mxu0
    %v799 = vadd.f32 %v631, %v798
    %v800 = vpop.f32.mrf.mxu0
    %801 = vmatprep.mubr.bf16.mxu0 0
    %802 = vmatmul.mubr.bf16.gmra.mxu0 %v588
    %v803 = vpop.f32.mrf.mxu0
    %v804 = vadd.f32 %v631, %v803
    %v805 = vpop.f32.mrf.mxu0
    %v806 = vpop.f32.mrf.mxu0
    %v807 = vadd.f32 %v631, %v806
    %v808 = vpop.f32.mrf.mxu0
    %809 = vmatprep.mubr.bf16.mxu0 0
    %810 = vmatmul.mubr.bf16.gmra.mxu0 %v589
    %v811 = vpop.f32.mrf.mxu0
    %v812 = vadd.f32 %v631, %v811
    %v813 = vpop.f32.mrf.mxu0
    %v814 = vpop.f32.mrf.mxu0
    %v815 = vadd.f32 %v631, %v814
    %v816 = vpop.f32.mrf.mxu0
    %817 = vmatprep.mubr.bf16.mxu0 0
    %818 = vmatmul.mubr.bf16.gmra.mxu0 %v590
    %v819 = vpop.f32.mrf.mxu0
    %v820 = vadd.f32 %v631, %v819
    %v821 = vpop.f32.mrf.mxu0
    %v822 = vpop.f32.mrf.mxu0
    %v823 = vadd.f32 %v631, %v822
    %v824 = vpop.f32.mrf.mxu0
    %825 = vmatprep.mubr.bf16.mxu0 0
    %826 = vmatmul.mubr.bf16.gmra.mxu0 %v591
    %v827 = vpop.f32.mrf.mxu0
    %v828 = vadd.f32 %v631, %v827
    %v829 = vpop.f32.mrf.mxu0
    %v830 = vpop.f32.mrf.mxu0
    %v831 = vadd.f32 %v631, %v830
    %v832 = vpop.f32.mrf.mxu0
    %833 = vmatprep.mubr.bf16.mxu0 0
    %834 = vmatmul.mubr.bf16.gmra.mxu0 %v592
    %v835 = vpop.f32.mrf.mxu0
    %v836 = vadd.f32 %v631, %v835
    %v837 = vpop.f32.mrf.mxu0
    %v838 = vpop.f32.mrf.mxu0
    %v839 = vadd.f32 %v631, %v838
    %v840 = vpop.f32.mrf.mxu0
    %841 = vmatprep.mubr.bf16.mxu0 0
    %842 = vmatmul.mubr.bf16.gmra.mxu0 %v593
    %v843 = vpop.f32.mrf.mxu0
    %v844 = vadd.f32 %v631, %v843
    %v845 = vpop.f32.mrf.mxu0
    %v846 = vpop.f32.mrf.mxu0
    %v847 = vadd.f32 %v631, %v846
    %v848 = vpop.f32.mrf.mxu0
    %849 = vmatprep.mubr.bf16.mxu0 0
    %850 = vmatmul.mubr.bf16.gmra.mxu0 %v594
    %v851 = vpop.f32.mrf.mxu0
    %v852 = vadd.f32 %v631, %v851
    %v853 = vpop.f32.mrf.mxu0
    %v854 = vpop.f32.mrf.mxu0
    %v855 = vadd.f32 %v631, %v854
    %v856 = vpop.f32.mrf.mxu0
    %857 = vmatprep.mubr.bf16.mxu0 0
    %858 = vmatmul.mubr.bf16.gmra.mxu0 %v595
    %v859 = vpop.f32.mrf.mxu0
    %v860 = vadd.f32 %v631, %v859
    %v861 = vpop.f32.mrf.mxu0
    %v862 = vpop.f32.mrf.mxu0
    %v863 = vadd.f32 %v631, %v862
    %v864 = vpop.f32.mrf.mxu0
    %865 = vmatprep.mubr.bf16.mxu0 0
    %866 = vmatmul.mubr.bf16.gmra.mxu0 %v596
    %v867 = vpop.f32.mrf.mxu0
    %v868 = vadd.f32 %v631, %v867
    %v869 = vpop.f32.mrf.mxu0
    %v870 = vpop.f32.mrf.mxu0
    %v871 = vadd.f32 %v631, %v870
    %v872 = vpop.f32.mrf.mxu0
    %873 = vmatprep.mubr.bf16.mxu0 0
    %874 = vmatmul.mubr.bf16.gmra.mxu0 %v597
    %v875 = vpop.f32.mrf.mxu0
    %v876 = vadd.f32 %v631, %v875
    %v877 = vpop.f32.mrf.mxu0
    %v878 = vpop.f32.mrf.mxu0
    %v879 = vadd.f32 %v631, %v878
    %v880 = vpop.f32.mrf.mxu0
    %881 = vmatprep.mubr.bf16.mxu0 0
    %882 = vmatmul.mubr.bf16.gmra.mxu0 %v598
    %v883 = vpop.f32.mrf.mxu0
    %v884 = vadd.f32 %v631, %v883
    %v885 = vpop.f32.mrf.mxu0
    %v886 = vpop.f32.mrf.mxu0
    %v887 = vadd.f32 %v631, %v886
    %v888 = vpop.f32.mrf.mxu0
    %889 = vmatprep.mubr.bf16.mxu0 0
    %890 = vmatmul.mubr.bf16.gmra.mxu0 %v599
    %v891 = vpop.f32.mrf.mxu0
    %v892 = vadd.f32 %v631, %v891
    %v893 = vpop.f32.mrf.mxu0
    %v894 = vpop.f32.mrf.mxu0
    %v895 = vadd.f32 %v631, %v894
    %v896 = vpop.f32.mrf.mxu0
    %897 = vmatprep.mubr.bf16.mxu0 0
    %898 = vmatmul.mubr.bf16.gmra.mxu0 %v600
    %v899 = vpop.f32.mrf.mxu0
    %v900 = vadd.f32 %v631, %v899
    %v901 = vpop.f32.mrf.mxu0
    %v902 = vpop.f32.mrf.mxu0
    %v903 = vadd.f32 %v631, %v902
    %v904 = vpop.f32.mrf.mxu0
    %905 = vmatprep.mubr.bf16.mxu0 0
    %906 = vmatmul.mubr.bf16.gmra.mxu0 %v601
    %v907 = vpop.f32.mrf.mxu0
    %v908 = vadd.f32 %v631, %v907
    %v909 = vpop.f32.mrf.mxu0
    %v910 = vpop.f32.mrf.mxu0
    %v911 = vadd.f32 %v631, %v910
    %v912 = vpop.f32.mrf.mxu0
    %913 = vmatprep.mubr.bf16.mxu0 0
    %914 = vmatmul.mubr.bf16.gmra.mxu0 %v602
    %v915 = vpop.f32.mrf.mxu0
    %v916 = vadd.f32 %v631, %v915
    %v917 = vpop.f32.mrf.mxu0
    %v918 = vpop.f32.mrf.mxu0
    %v919 = vadd.f32 %v631, %v918
    %v920 = vpop.f32.mrf.mxu0
    %921 = vmatprep.mubr.bf16.mxu0 0
    %922 = vmatmul.mubr.bf16.gmra.mxu0 %v603
    %v923 = vpop.f32.mrf.mxu0
    %v924 = vadd.f32 %v631, %v923
    %v925 = vpop.f32.mrf.mxu0
    %v926 = vpop.f32.mrf.mxu0
    %v927 = vadd.f32 %v631, %v926
    %v928 = vpop.f32.mrf.mxu0
    %929 = vmatprep.mubr.bf16.mxu0 0
    %930 = vmatmul.mubr.bf16.gmra.mxu0 %v604
    %v931 = vpop.f32.mrf.mxu0
    %v932 = vadd.f32 %v631, %v931
    %v933 = vpop.f32.mrf.mxu0
    %v934 = vpop.f32.mrf.mxu0
    %v935 = vadd.f32 %v631, %v934
    %v936 = vpop.f32.mrf.mxu0
    %937 = vmatprep.mubr.bf16.mxu0 0
    %938 = vmatmul.mubr.bf16.gmra.mxu0 %v605
    %v939 = vpop.f32.mrf.mxu0
    %v940 = vadd.f32 %v631, %v939
    %v941 = vpop.f32.mrf.mxu0
    %v942 = vpop.f32.mrf.mxu0
    %v943 = vadd.f32 %v631, %v942
    %v944 = vpop.f32.mrf.mxu0
    %945 = vmatprep.mubr.bf16.mxu0 0
    %946 = vmatmul.mubr.bf16.gmra.mxu0 %v606
    %v947 = vpop.f32.mrf.mxu0
    %v948 = vadd.f32 %v631, %v947
    %v949 = vpop.f32.mrf.mxu0
    %v950 = vpop.f32.mrf.mxu0
    %v951 = vadd.f32 %v631, %v950
    %v952 = vpop.f32.mrf.mxu0
    %953 = vmatprep.mubr.bf16.mxu0 0
    %954 = vmatmul.mubr.bf16.gmra.mxu0 %v607
    %v955 = vpop.f32.mrf.mxu0
    %v956 = vadd.f32 %v631, %v955
    %v957 = vpop.f32.mrf.mxu0
    %v958 = vpop.f32.mrf.mxu0
    %v959 = vadd.f32 %v631, %v958
    %v960 = vpop.f32.mrf.mxu0
    %961 = vmatprep.mubr.bf16.mxu0 0
    %962 = vmatmul.mubr.bf16.gmra.mxu0 %v608
    %v963 = vpop.f32.mrf.mxu0
    %v964 = vadd.f32 %v631, %v963
    %v965 = vpop.f32.mrf.mxu0
    %v966 = vpop.f32.mrf.mxu0
    %v967 = vadd.f32 %v631, %v966
    %v968 = vpop.f32.mrf.mxu0
    %969 = vdwg.mxu0
    %v970 = vmax.f32 %v716, 0.0
    %v971 = vmax.f32 %v719, 0.0
    %v972 = vmax.f32 %v724, 0.0
    %v973 = vmax.f32 %v727, 0.0
    %v974 = vmax.f32 %v732, 0.0
    %v975 = vmax.f32 %v735, 0.0
    %v976 = vmax.f32 %v740, 0.0
    %v977 = vmax.f32 %v743, 0.0
    %v978 = vmax.f32 %v748, 0.0
    %v979 = vmax.f32 %v751, 0.0
    %v980 = vmax.f32 %v756, 0.0
    %v981 = vmax.f32 %v759, 0.0
    %v982 = vmax.f32 %v764, 0.0
    %v983 = vmax.f32 %v767, 0.0
    %v984 = vmax.f32 %v772, 0.0
    %v985 = vmax.f32 %v775, 0.0
    %v986 = vmax.f32 %v780, 0.0
    %v987 = vmax.f32 %v783, 0.0
    %v988 = vmax.f32 %v788, 0.0
    %v989 = vmax.f32 %v791, 0.0
    %v990 = vmax.f32 %v796, 0.0
    %v991 = vmax.f32 %v799, 0.0
    %v992 = vmax.f32 %v804, 0.0
    %v993 = vmax.f32 %v807, 0.0
    %v994 = vmax.f32 %v812, 0.0
    %v995 = vmax.f32 %v815, 0.0
    %v996 = vmax.f32 %v820, 0.0
    %v997 = vmax.f32 %v823, 0.0
    %v998 = vmax.f32 %v828, 0.0
    %v999 = vmax.f32 %v831, 0.0
    %v1000 = vmax.f32 %v836, 0.0
    %v1001 = vmax.f32 %v839, 0.0
    %v1002 = vmax.f32 %v844, 0.0
    %v1003 = vmax.f32 %v847, 0.0
    %v1004 = vmax.f32 %v852, 0.0
    %v1005 = vmax.f32 %v855, 0.0
    %v1006 = vmax.f32 %v860, 0.0
    %v1007 = vmax.f32 %v863, 0.0
    %v1008 = vmax.f32 %v868, 0.0
    %v1009 = vmax.f32 %v871, 0.0
    %v1010 = vmax.f32 %v876, 0.0
    %v1011 = vmax.f32 %v879, 0.0
    %v1012 = vmax.f32 %v884, 0.0
    %v1013 = vmax.f32 %v887, 0.0
    %v1014 = vmax.f32 %v892, 0.0
    %v1015 = vmax.f32 %v895, 0.0
    %v1016 = vmax.f32 %v900, 0.0
    %v1017 = vmax.f32 %v903, 0.0
    %v1018 = vmax.f32 %v908, 0.0
    %v1019 = vmax.f32 %v911, 0.0
    %v1020 = vmax.f32 %v916, 0.0
    %v1021 = vmax.f32 %v919, 0.0
    %v1022 = vmax.f32 %v924, 0.0
    %v1023 = vmax.f32 %v927, 0.0
    %v1024 = vmax.f32 %v932, 0.0
    %v1025 = vmax.f32 %v935, 0.0
    %v1026 = vmax.f32 %v940, 0.0
    %v1027 = vmax.f32 %v943, 0.0
    %v1028 = vmax.f32 %v948, 0.0
    %v1029 = vmax.f32 %v951, 0.0
    %v1030 = vmax.f32 %v956, 0.0
    %v1031 = vmax.f32 %v959, 0.0
    %v1032 = vmax.f32 %v964, 0.0
    %v1033 = vmax.f32 %v967, 0.0
    %v1034 = vpack.c.bf16 %v971, %v970
    %v1035 = vpack.c.bf16 %v973, %v972
    %v1036 = vpack.c.bf16 %v975, %v974
    %v1037 = vpack.c.bf16 %v977, %v976
    %v1038 = vpack.c.bf16 %v979, %v978
    %v1039 = vpack.c.bf16 %v981, %v980
    %v1040 = vpack.c.bf16 %v983, %v982
    %v1041 = vpack.c.bf16 %v985, %v984
    %v1042 = vpack.c.bf16 %v987, %v986
    %v1043 = vpack.c.bf16 %v989, %v988
    %v1044 = vpack.c.bf16 %v991, %v990
    %v1045 = vpack.c.bf16 %v993, %v992
    %v1046 = vpack.c.bf16 %v995, %v994
    %v1047 = vpack.c.bf16 %v997, %v996
    %v1048 = vpack.c.bf16 %v999, %v998
    %v1049 = vpack.c.bf16 %v1001, %v1000
    %v1050 = vpack.c.bf16 %v1003, %v1002
    %v1051 = vpack.c.bf16 %v1005, %v1004
    %v1052 = vpack.c.bf16 %v1007, %v1006
    %v1053 = vpack.c.bf16 %v1009, %v1008
    %v1054 = vpack.c.bf16 %v1011, %v1010
    %v1055 = vpack.c.bf16 %v1013, %v1012
    %v1056 = vpack.c.bf16 %v1015, %v1014
    %v1057 = vpack.c.bf16 %v1017, %v1016
    %v1058 = vpack.c.bf16 %v1019, %v1018
    %v1059 = vpack.c.bf16 %v1021, %v1020
    %v1060 = vpack.c.bf16 %v1023, %v1022
    %v1061 = vpack.c.bf16 %v1025, %v1024
    %v1062 = vpack.c.bf16 %v1027, %v1026
    %v1063 = vpack.c.bf16 %v1029, %v1028
    %v1064 = vpack.c.bf16 %v1031, %v1030
    %v1065 = vpack.c.bf16 %v1033, %v1032
    %s1066 = scalar_lea.vmem %s2, 64
    %v1067 = vld [vmem:[%s1066] sm:$0xf]
    %v1068 = vld [vmem:[%s1066 + $0x4] sm:$0xf]
    %v1069 = vld [vmem:[%s1066 + $0x8] sm:$0xf]
    %v1070 = vld [vmem:[%s1066 + $0xc] sm:$0xf]
    %v1071 = vld [vmem:[%s1066 + $0x10] sm:$0xf]
    %v1072 = vld [vmem:[%s1066 + $0x14] sm:$0xf]
    %v1073 = vld [vmem:[%s1066 + $0x18] sm:$0xf]
    %v1074 = vld [vmem:[%s1066 + $0x1c] sm:$0xf]
    %v1075 = vld [vmem:[%s1066 + $0x20] sm:$0xf]
    %v1076 = vld [vmem:[%s1066 + $0x24] sm:$0xf]
    %v1077 = vld [vmem:[%s1066 + $0x28] sm:$0xf]
    %v1078 = vld [vmem:[%s1066 + $0x2c] sm:$0xf]
    %v1079 = vld [vmem:[%s1066 + $0x30] sm:$0xf]
    %v1080 = vld [vmem:[%s1066 + $0x34] sm:$0xf]
    %v1081 = vld [vmem:[%s1066 + $0x38] sm:$0xf]
    %v1082 = vld [vmem:[%s1066 + $0x3c] sm:$0xf]
    %s1083 = scalar_lea.vmem %s3, 2
    %v1084 = vld [vmem:[%s1083] sm:$0x1]
    %v1086 = vlaneseq
    %v1087 = vshrl.u32 %v1086, 7
    %v1088 = vsub.s32 0, %v1087
    %v1089 = vrot.slane %v1084, %v1088
    %v1107 = vunpack.c.l.b16 %v1067
    %v1108 = vunpack.c.l.b16 %v1068
    %v1109 = vunpack.c.l.b16 %v1069
    %v1110 = vunpack.c.l.b16 %v1070
    %v1111 = vunpack.c.l.b16 %v1071
    %v1112 = vunpack.c.l.b16 %v1072
    %v1113 = vunpack.c.l.b16 %v1073
    %v1114 = vunpack.c.l.b16 %v1074
    %v1115 = vunpack.c.l.b16 %v1075
    %v1116 = vunpack.c.l.b16 %v1076
    %v1117 = vunpack.c.l.b16 %v1077
    %v1118 = vunpack.c.l.b16 %v1078
    %v1119 = vunpack.c.l.b16 %v1079
    %v1120 = vunpack.c.l.b16 %v1080
    %v1121 = vunpack.c.l.b16 %v1081
    %v1122 = vunpack.c.l.b16 %v1082
    %v1123 = vpack.c.b16 %v1108, %v1107
    %v1124 = vpack.c.b16 %v1110, %v1109
    %v1125 = vpack.c.b16 %v1112, %v1111
    %v1126 = vpack.c.b16 %v1114, %v1113
    %v1127 = vpack.c.b16 %v1116, %v1115
    %v1128 = vpack.c.b16 %v1118, %v1117
    %v1129 = vpack.c.b16 %v1120, %v1119
    %v1130 = vpack.c.b16 %v1122, %v1121
    %1139 = vmatprep.subr.bf16.mxu0 0
    %1140 = vmatpush1.bf16.msra.mxu0 %v1130
    %1141 = vmatprep.subr.bf16.mxu0 0
    %1142 = vmatpush1.bf16.msra.mxu0 %v1129
    %1143 = vmatprep.subr.bf16.mxu0 0
    %1144 = vmatpush1.bf16.msra.mxu0 %v1128
    %1145 = vmatprep.subr.bf16.mxu0 0
    %1146 = vmatpush1.bf16.msra.mxu0 %v1127
    %1147 = vmatprep.subr.bf16.mxu0 0
    %1148 = vmatpush1.bf16.msra.mxu0 %v1126
    %1149 = vmatprep.subr.bf16.mxu0 0
    %1150 = vmatpush1.bf16.msra.mxu0 %v1125
    %1151 = vmatprep.subr.bf16.mxu0 0
    %1152 = vmatpush1.bf16.msra.mxu0 %v1124
    %1153 = vmatprep.subr.bf16.mxu0 0
    %1154 = vmatpush1.bf16.msra.mxu0 %v1123
    %1155 = vmatprep.subr.bf16.mxu0 0
    %1156 = vmatpush2.bf16.msra.mxu0 0
    %1157 = vmatprep.subr.bf16.mxu0 0
    %1158 = vmatpush2.bf16.msra.mxu0 0
    %1159 = vmatprep.subr.bf16.mxu0 0
    %1160 = vmatpush2.bf16.msra.mxu0 0
    %1161 = vmatprep.subr.bf16.mxu0 0
    %1162 = vmatpush2.bf16.msra.mxu0 0
    %1163 = vmatprep.subr.bf16.mxu0 0
    %1164 = vmatpush2.bf16.msra.mxu0 0
    %1165 = vmatprep.subr.bf16.mxu0 0
    %1166 = vmatpush2.bf16.msra.mxu0 0
    %1167 = vmatprep.subr.bf16.mxu0 0
    %1168 = vmatpush2.bf16.msra.mxu0 0
    %1169 = vmatprep.subr.bf16.mxu0 0
    %1170 = vmatpush2.bf16.msra.mxu0 0
    %1171 = vmatprep.mubr.bf16.mxu0 0
    %1172 = vmatmul.mubr.bf16.gmra.mxu0 %v1034
    %v1173 = vpop.f32.mrf.mxu0
    %v1174 = vadd.f32 %v1089, %v1173
    %v1175 = vpop.f32.mrf.mxu0
    %v1176 = vpop.f32.mrf.mxu0
    %v1177 = vadd.f32 %v1089, %v1176
    %v1178 = vpop.f32.mrf.mxu0
    %1179 = vmatprep.mubr.bf16.mxu0 0
    %1180 = vmatmul.mubr.bf16.gmra.mxu0 %v1035
    %v1181 = vpop.f32.mrf.mxu0
    %v1182 = vadd.f32 %v1089, %v1181
    %v1183 = vpop.f32.mrf.mxu0
    %v1184 = vpop.f32.mrf.mxu0
    %v1185 = vadd.f32 %v1089, %v1184
    %v1186 = vpop.f32.mrf.mxu0
    %1187 = vmatprep.mubr.bf16.mxu0 0
    %1188 = vmatmul.mubr.bf16.gmra.mxu0 %v1036
    %v1189 = vpop.f32.mrf.mxu0
    %v1190 = vadd.f32 %v1089, %v1189
    %v1191 = vpop.f32.mrf.mxu0
    %v1192 = vpop.f32.mrf.mxu0
    %v1193 = vadd.f32 %v1089, %v1192
    %v1194 = vpop.f32.mrf.mxu0
    %1195 = vmatprep.mubr.bf16.mxu0 0
    %1196 = vmatmul.mubr.bf16.gmra.mxu0 %v1037
    %v1197 = vpop.f32.mrf.mxu0
    %v1198 = vadd.f32 %v1089, %v1197
    %v1199 = vpop.f32.mrf.mxu0
    %v1200 = vpop.f32.mrf.mxu0
    %v1201 = vadd.f32 %v1089, %v1200
    %v1202 = vpop.f32.mrf.mxu0
    %1203 = vmatprep.mubr.bf16.mxu0 0
    %1204 = vmatmul.mubr.bf16.gmra.mxu0 %v1038
    %v1205 = vpop.f32.mrf.mxu0
    %v1206 = vadd.f32 %v1089, %v1205
    %v1207 = vpop.f32.mrf.mxu0
    %v1208 = vpop.f32.mrf.mxu0
    %v1209 = vadd.f32 %v1089, %v1208
    %v1210 = vpop.f32.mrf.mxu0
    %1211 = vmatprep.mubr.bf16.mxu0 0
    %1212 = vmatmul.mubr.bf16.gmra.mxu0 %v1039
    %v1213 = vpop.f32.mrf.mxu0
    %v1214 = vadd.f32 %v1089, %v1213
    %v1215 = vpop.f32.mrf.mxu0
    %v1216 = vpop.f32.mrf.mxu0
    %v1217 = vadd.f32 %v1089, %v1216
    %v1218 = vpop.f32.mrf.mxu0
    %1219 = vmatprep.mubr.bf16.mxu0 0
    %1220 = vmatmul.mubr.bf16.gmra.mxu0 %v1040
    %v1221 = vpop.f32.mrf.mxu0
    %v1222 = vadd.f32 %v1089, %v1221
    %v1223 = vpop.f32.mrf.mxu0
    %v1224 = vpop.f32.mrf.mxu0
    %v1225 = vadd.f32 %v1089, %v1224
    %v1226 = vpop.f32.mrf.mxu0
    %1227 = vmatprep.mubr.bf16.mxu0 0
    %1228 = vmatmul.mubr.bf16.gmra.mxu0 %v1041
    %v1229 = vpop.f32.mrf.mxu0
    %v1230 = vadd.f32 %v1089, %v1229
    %v1231 = vpop.f32.mrf.mxu0
    %v1232 = vpop.f32.mrf.mxu0
    %v1233 = vadd.f32 %v1089, %v1232
    %v1234 = vpop.f32.mrf.mxu0
    %1235 = vmatprep.mubr.bf16.mxu0 0
    %1236 = vmatmul.mubr.bf16.gmra.mxu0 %v1042
    %v1237 = vpop.f32.mrf.mxu0
    %v1238 = vadd.f32 %v1089, %v1237
    %v1239 = vpop.f32.mrf.mxu0
    %v1240 = vpop.f32.mrf.mxu0
    %v1241 = vadd.f32 %v1089, %v1240
    %v1242 = vpop.f32.mrf.mxu0
    %1243 = vmatprep.mubr.bf16.mxu0 0
    %1244 = vmatmul.mubr.bf16.gmra.mxu0 %v1043
    %v1245 = vpop.f32.mrf.mxu0
    %v1246 = vadd.f32 %v1089, %v1245
    %v1247 = vpop.f32.mrf.mxu0
    %v1248 = vpop.f32.mrf.mxu0
    %v1249 = vadd.f32 %v1089, %v1248
    %v1250 = vpop.f32.mrf.mxu0
    %1251 = vmatprep.mubr.bf16.mxu0 0
    %1252 = vmatmul.mubr.bf16.gmra.mxu0 %v1044
    %v1253 = vpop.f32.mrf.mxu0
    %v1254 = vadd.f32 %v1089, %v1253
    %v1255 = vpop.f32.mrf.mxu0
    %v1256 = vpop.f32.mrf.mxu0
    %v1257 = vadd.f32 %v1089, %v1256
    %v1258 = vpop.f32.mrf.mxu0
    %1259 = vmatprep.mubr.bf16.mxu0 0
    %1260 = vmatmul.mubr.bf16.gmra.mxu0 %v1045
    %v1261 = vpop.f32.mrf.mxu0
    %v1262 = vadd.f32 %v1089, %v1261
    %v1263 = vpop.f32.mrf.mxu0
    %v1264 = vpop.f32.mrf.mxu0
    %v1265 = vadd.f32 %v1089, %v1264
    %v1266 = vpop.f32.mrf.mxu0
    %1267 = vmatprep.mubr.bf16.mxu0 0
    %1268 = vmatmul.mubr.bf16.gmra.mxu0 %v1046
    %v1269 = vpop.f32.mrf.mxu0
    %v1270 = vadd.f32 %v1089, %v1269
    %v1271 = vpop.f32.mrf.mxu0
    %v1272 = vpop.f32.mrf.mxu0
    %v1273 = vadd.f32 %v1089, %v1272
    %v1274 = vpop.f32.mrf.mxu0
    %1275 = vmatprep.mubr.bf16.mxu0 0
    %1276 = vmatmul.mubr.bf16.gmra.mxu0 %v1047
    %v1277 = vpop.f32.mrf.mxu0
    %v1278 = vadd.f32 %v1089, %v1277
    %v1279 = vpop.f32.mrf.mxu0
    %v1280 = vpop.f32.mrf.mxu0
    %v1281 = vadd.f32 %v1089, %v1280
    %v1282 = vpop.f32.mrf.mxu0
    %1283 = vmatprep.mubr.bf16.mxu0 0
    %1284 = vmatmul.mubr.bf16.gmra.mxu0 %v1048
    %v1285 = vpop.f32.mrf.mxu0
    %v1286 = vadd.f32 %v1089, %v1285
    %v1287 = vpop.f32.mrf.mxu0
    %v1288 = vpop.f32.mrf.mxu0
    %v1289 = vadd.f32 %v1089, %v1288
    %v1290 = vpop.f32.mrf.mxu0
    %1291 = vmatprep.mubr.bf16.mxu0 0
    %1292 = vmatmul.mubr.bf16.gmra.mxu0 %v1049
    %v1293 = vpop.f32.mrf.mxu0
    %v1294 = vadd.f32 %v1089, %v1293
    %v1295 = vpop.f32.mrf.mxu0
    %v1296 = vpop.f32.mrf.mxu0
    %v1297 = vadd.f32 %v1089, %v1296
    %v1298 = vpop.f32.mrf.mxu0
    %1299 = vmatprep.mubr.bf16.mxu0 0
    %1300 = vmatmul.mubr.bf16.gmra.mxu0 %v1050
    %v1301 = vpop.f32.mrf.mxu0
    %v1302 = vadd.f32 %v1089, %v1301
    %v1303 = vpop.f32.mrf.mxu0
    %v1304 = vpop.f32.mrf.mxu0
    %v1305 = vadd.f32 %v1089, %v1304
    %v1306 = vpop.f32.mrf.mxu0
    %1307 = vmatprep.mubr.bf16.mxu0 0
    %1308 = vmatmul.mubr.bf16.gmra.mxu0 %v1051
    %v1309 = vpop.f32.mrf.mxu0
    %v1310 = vadd.f32 %v1089, %v1309
    %v1311 = vpop.f32.mrf.mxu0
    %v1312 = vpop.f32.mrf.mxu0
    %v1313 = vadd.f32 %v1089, %v1312
    %v1314 = vpop.f32.mrf.mxu0
    %1315 = vmatprep.mubr.bf16.mxu0 0
    %1316 = vmatmul.mubr.bf16.gmra.mxu0 %v1052
    %v1317 = vpop.f32.mrf.mxu0
    %v1318 = vadd.f32 %v1089, %v1317
    %v1319 = vpop.f32.mrf.mxu0
    %v1320 = vpop.f32.mrf.mxu0
    %v1321 = vadd.f32 %v1089, %v1320
    %v1322 = vpop.f32.mrf.mxu0
    %1323 = vmatprep.mubr.bf16.mxu0 0
    %1324 = vmatmul.mubr.bf16.gmra.mxu0 %v1053
    %v1325 = vpop.f32.mrf.mxu0
    %v1326 = vadd.f32 %v1089, %v1325
    %v1327 = vpop.f32.mrf.mxu0
    %v1328 = vpop.f32.mrf.mxu0
    %v1329 = vadd.f32 %v1089, %v1328
    %v1330 = vpop.f32.mrf.mxu0
    %1331 = vmatprep.mubr.bf16.mxu0 0
    %1332 = vmatmul.mubr.bf16.gmra.mxu0 %v1054
    %v1333 = vpop.f32.mrf.mxu0
    %v1334 = vadd.f32 %v1089, %v1333
    %v1335 = vpop.f32.mrf.mxu0
    %v1336 = vpop.f32.mrf.mxu0
    %v1337 = vadd.f32 %v1089, %v1336
    %v1338 = vpop.f32.mrf.mxu0
    %1339 = vmatprep.mubr.bf16.mxu0 0
    %1340 = vmatmul.mubr.bf16.gmra.mxu0 %v1055
    %v1341 = vpop.f32.mrf.mxu0
    %v1342 = vadd.f32 %v1089, %v1341
    %v1343 = vpop.f32.mrf.mxu0
    %v1344 = vpop.f32.mrf.mxu0
    %v1345 = vadd.f32 %v1089, %v1344
    %v1346 = vpop.f32.mrf.mxu0
    %1347 = vmatprep.mubr.bf16.mxu0 0
    %1348 = vmatmul.mubr.bf16.gmra.mxu0 %v1056
    %v1349 = vpop.f32.mrf.mxu0
    %v1350 = vadd.f32 %v1089, %v1349
    %v1351 = vpop.f32.mrf.mxu0
    %v1352 = vpop.f32.mrf.mxu0
    %v1353 = vadd.f32 %v1089, %v1352
    %v1354 = vpop.f32.mrf.mxu0
    %1355 = vmatprep.mubr.bf16.mxu0 0
    %1356 = vmatmul.mubr.bf16.gmra.mxu0 %v1057
    %v1357 = vpop.f32.mrf.mxu0
    %v1358 = vadd.f32 %v1089, %v1357
    %v1359 = vpop.f32.mrf.mxu0
    %v1360 = vpop.f32.mrf.mxu0
    %v1361 = vadd.f32 %v1089, %v1360
    %v1362 = vpop.f32.mrf.mxu0
    %1363 = vmatprep.mubr.bf16.mxu0 0
    %1364 = vmatmul.mubr.bf16.gmra.mxu0 %v1058
    %v1365 = vpop.f32.mrf.mxu0
    %v1366 = vadd.f32 %v1089, %v1365
    %v1367 = vpop.f32.mrf.mxu0
    %v1368 = vpop.f32.mrf.mxu0
    %v1369 = vadd.f32 %v1089, %v1368
    %v1370 = vpop.f32.mrf.mxu0
    %1371 = vmatprep.mubr.bf16.mxu0 0
    %1372 = vmatmul.mubr.bf16.gmra.mxu0 %v1059
    %v1373 = vpop.f32.mrf.mxu0
    %v1374 = vadd.f32 %v1089, %v1373
    %v1375 = vpop.f32.mrf.mxu0
    %v1376 = vpop.f32.mrf.mxu0
    %v1377 = vadd.f32 %v1089, %v1376
    %v1378 = vpop.f32.mrf.mxu0
    %1379 = vmatprep.mubr.bf16.mxu0 0
    %1380 = vmatmul.mubr.bf16.gmra.mxu0 %v1060
    %v1381 = vpop.f32.mrf.mxu0
    %v1382 = vadd.f32 %v1089, %v1381
    %v1383 = vpop.f32.mrf.mxu0
    %v1384 = vpop.f32.mrf.mxu0
    %v1385 = vadd.f32 %v1089, %v1384
    %v1386 = vpop.f32.mrf.mxu0
    %1387 = vmatprep.mubr.bf16.mxu0 0
    %1388 = vmatmul.mubr.bf16.gmra.mxu0 %v1061
    %v1389 = vpop.f32.mrf.mxu0
    %v1390 = vadd.f32 %v1089, %v1389
    %v1391 = vpop.f32.mrf.mxu0
    %v1392 = vpop.f32.mrf.mxu0
    %v1393 = vadd.f32 %v1089, %v1392
    %v1394 = vpop.f32.mrf.mxu0
    %1395 = vmatprep.mubr.bf16.mxu0 0
    %1396 = vmatmul.mubr.bf16.gmra.mxu0 %v1062
    %v1397 = vpop.f32.mrf.mxu0
    %v1398 = vadd.f32 %v1089, %v1397
    %v1399 = vpop.f32.mrf.mxu0
    %v1400 = vpop.f32.mrf.mxu0
    %v1401 = vadd.f32 %v1089, %v1400
    %v1402 = vpop.f32.mrf.mxu0
    %1403 = vmatprep.mubr.bf16.mxu0 0
    %1404 = vmatmul.mubr.bf16.gmra.mxu0 %v1063
    %v1405 = vpop.f32.mrf.mxu0
    %v1406 = vadd.f32 %v1089, %v1405
    %v1407 = vpop.f32.mrf.mxu0
    %v1408 = vpop.f32.mrf.mxu0
    %v1409 = vadd.f32 %v1089, %v1408
    %v1410 = vpop.f32.mrf.mxu0
    %1411 = vmatprep.mubr.bf16.mxu0 0
    %1412 = vmatmul.mubr.bf16.gmra.mxu0 %v1064
    %v1413 = vpop.f32.mrf.mxu0
    %v1414 = vadd.f32 %v1089, %v1413
    %v1415 = vpop.f32.mrf.mxu0
    %v1416 = vpop.f32.mrf.mxu0
    %v1417 = vadd.f32 %v1089, %v1416
    %v1418 = vpop.f32.mrf.mxu0
    %1419 = vmatprep.mubr.bf16.mxu0 0
    %1420 = vmatmul.mubr.bf16.gmra.mxu0 %v1065
    %v1421 = vpop.f32.mrf.mxu0
    %v1422 = vadd.f32 %v1089, %v1421
    %v1423 = vpop.f32.mrf.mxu0
    %v1424 = vpop.f32.mrf.mxu0
    %v1425 = vadd.f32 %v1089, %v1424
    %v1426 = vpop.f32.mrf.mxu0
    %1427 = vdwg.mxu0
    %v1428 = vlaneseq
    %v1429 = vand.u32 %v1428, 127
    %vm1430 = vcmp.lt.s32.totalorder %v1429, 2
    %v1431 = vsel %vm1430, %v1174, -1e+30
    %v1432 = vsel %vm1430, %v1177, -1e+30
    %v1433 = vsel %vm1430, %v1182, -1e+30
    %v1434 = vsel %vm1430, %v1185, -1e+30
    %v1435 = vsel %vm1430, %v1190, -1e+30
    %v1436 = vsel %vm1430, %v1193, -1e+30
    %v1437 = vsel %vm1430, %v1198, -1e+30
    %v1438 = vsel %vm1430, %v1201, -1e+30
    %v1439 = vsel %vm1430, %v1206, -1e+30
    %v1440 = vsel %vm1430, %v1209, -1e+30
    %v1441 = vsel %vm1430, %v1214, -1e+30
    %v1442 = vsel %vm1430, %v1217, -1e+30
    %v1443 = vsel %vm1430, %v1222, -1e+30
    %v1444 = vsel %vm1430, %v1225, -1e+30
    %v1445 = vsel %vm1430, %v1230, -1e+30
    %v1446 = vsel %vm1430, %v1233, -1e+30
    %v1447 = vsel %vm1430, %v1238, -1e+30
    %v1448 = vsel %vm1430, %v1241, -1e+30
    %v1449 = vsel %vm1430, %v1246, -1e+30
    %v1450 = vsel %vm1430, %v1249, -1e+30
    %v1451 = vsel %vm1430, %v1254, -1e+30
    %v1452 = vsel %vm1430, %v1257, -1e+30
    %v1453 = vsel %vm1430, %v1262, -1e+30
    %v1454 = vsel %vm1430, %v1265, -1e+30
    %v1455 = vsel %vm1430, %v1270, -1e+30
    %v1456 = vsel %vm1430, %v1273, -1e+30
    %v1457 = vsel %vm1430, %v1278, -1e+30
    %v1458 = vsel %vm1430, %v1281, -1e+30
    %v1459 = vsel %vm1430, %v1286, -1e+30
    %v1460 = vsel %vm1430, %v1289, -1e+30
    %v1461 = vsel %vm1430, %v1294, -1e+30
    %v1462 = vsel %vm1430, %v1297, -1e+30
    %v1463 = vsel %vm1430, %v1302, -1e+30
    %v1464 = vsel %vm1430, %v1305, -1e+30
    %v1465 = vsel %vm1430, %v1310, -1e+30
    %v1466 = vsel %vm1430, %v1313, -1e+30
    %v1467 = vsel %vm1430, %v1318, -1e+30
    %v1468 = vsel %vm1430, %v1321, -1e+30
    %v1469 = vsel %vm1430, %v1326, -1e+30
    %v1470 = vsel %vm1430, %v1329, -1e+30
    %v1471 = vsel %vm1430, %v1334, -1e+30
    %v1472 = vsel %vm1430, %v1337, -1e+30
    %v1473 = vsel %vm1430, %v1342, -1e+30
    %v1474 = vsel %vm1430, %v1345, -1e+30
    %v1475 = vsel %vm1430, %v1350, -1e+30
    %v1476 = vsel %vm1430, %v1353, -1e+30
    %v1477 = vsel %vm1430, %v1358, -1e+30
    %v1478 = vsel %vm1430, %v1361, -1e+30
    %v1479 = vsel %vm1430, %v1366, -1e+30
    %v1480 = vsel %vm1430, %v1369, -1e+30
    %v1481 = vsel %vm1430, %v1374, -1e+30
    %v1482 = vsel %vm1430, %v1377, -1e+30
    %v1483 = vsel %vm1430, %v1382, -1e+30
    %v1484 = vsel %vm1430, %v1385, -1e+30
    %v1485 = vsel %vm1430, %v1390, -1e+30
    %v1486 = vsel %vm1430, %v1393, -1e+30
    %v1487 = vsel %vm1430, %v1398, -1e+30
    %v1488 = vsel %vm1430, %v1401, -1e+30
    %v1489 = vsel %vm1430, %v1406, -1e+30
    %v1490 = vsel %vm1430, %v1409, -1e+30
    %v1491 = vsel %vm1430, %v1414, -1e+30
    %v1492 = vsel %vm1430, %v1417, -1e+30
    %v1493 = vsel %vm1430, %v1422, -1e+30
    %v1494 = vsel %vm1430, %v1425, -1e+30
    %1495 = vmax.xlane.f32.xlu0 %v1431
    %v1496 = vpop.xlane.xlu0 %1495
    %1497 = vmax.xlane.f32.xlu0 %v1432
    %v1498 = vpop.xlane.xlu0 %1497
    %1499 = vmax.xlane.f32.xlu0 %v1433
    %v1500 = vpop.xlane.xlu0 %1499
    %1501 = vmax.xlane.f32.xlu0 %v1434
    %v1502 = vpop.xlane.xlu0 %1501
    %1503 = vmax.xlane.f32.xlu0 %v1435
    %v1504 = vpop.xlane.xlu0 %1503
    %1505 = vmax.xlane.f32.xlu0 %v1436
    %v1506 = vpop.xlane.xlu0 %1505
    %1507 = vmax.xlane.f32.xlu0 %v1437
    %v1508 = vpop.xlane.xlu0 %1507
    %1509 = vmax.xlane.f32.xlu0 %v1438
    %v1510 = vpop.xlane.xlu0 %1509
    %1511 = vmax.xlane.f32.xlu0 %v1439
    %v1512 = vpop.xlane.xlu0 %1511
    %1513 = vmax.xlane.f32.xlu0 %v1440
    %v1514 = vpop.xlane.xlu0 %1513
    %1515 = vmax.xlane.f32.xlu0 %v1441
    %v1516 = vpop.xlane.xlu0 %1515
    %1517 = vmax.xlane.f32.xlu0 %v1442
    %v1518 = vpop.xlane.xlu0 %1517
    %1519 = vmax.xlane.f32.xlu0 %v1443
    %v1520 = vpop.xlane.xlu0 %1519
    %1521 = vmax.xlane.f32.xlu0 %v1444
    %v1522 = vpop.xlane.xlu0 %1521
    %1523 = vmax.xlane.f32.xlu0 %v1445
    %v1524 = vpop.xlane.xlu0 %1523
    %1525 = vmax.xlane.f32.xlu0 %v1446
    %v1526 = vpop.xlane.xlu0 %1525
    %1527 = vmax.xlane.f32.xlu0 %v1447
    %v1528 = vpop.xlane.xlu0 %1527
    %1529 = vmax.xlane.f32.xlu0 %v1448
    %v1530 = vpop.xlane.xlu0 %1529
    %1531 = vmax.xlane.f32.xlu0 %v1449
    %v1532 = vpop.xlane.xlu0 %1531
    %1533 = vmax.xlane.f32.xlu0 %v1450
    %v1534 = vpop.xlane.xlu0 %1533
    %1535 = vmax.xlane.f32.xlu0 %v1451
    %v1536 = vpop.xlane.xlu0 %1535
    %1537 = vmax.xlane.f32.xlu0 %v1452
    %v1538 = vpop.xlane.xlu0 %1537
    %1539 = vmax.xlane.f32.xlu0 %v1453
    %v1540 = vpop.xlane.xlu0 %1539
    %1541 = vmax.xlane.f32.xlu0 %v1454
    %v1542 = vpop.xlane.xlu0 %1541
    %1543 = vmax.xlane.f32.xlu0 %v1455
    %v1544 = vpop.xlane.xlu0 %1543
    %1545 = vmax.xlane.f32.xlu0 %v1456
    %v1546 = vpop.xlane.xlu0 %1545
    %1547 = vmax.xlane.f32.xlu0 %v1457
    %v1548 = vpop.xlane.xlu0 %1547
    %1549 = vmax.xlane.f32.xlu0 %v1458
    %v1550 = vpop.xlane.xlu0 %1549
    %1551 = vmax.xlane.f32.xlu0 %v1459
    %v1552 = vpop.xlane.xlu0 %1551
    %1553 = vmax.xlane.f32.xlu0 %v1460
    %v1554 = vpop.xlane.xlu0 %1553
    %1555 = vmax.xlane.f32.xlu0 %v1461
    %v1556 = vpop.xlane.xlu0 %1555
    %1557 = vmax.xlane.f32.xlu0 %v1462
    %v1558 = vpop.xlane.xlu0 %1557
    %1559 = vmax.xlane.f32.xlu0 %v1463
    %v1560 = vpop.xlane.xlu0 %1559
    %1561 = vmax.xlane.f32.xlu0 %v1464
    %v1562 = vpop.xlane.xlu0 %1561
    %1563 = vmax.xlane.f32.xlu0 %v1465
    %v1564 = vpop.xlane.xlu0 %1563
    %1565 = vmax.xlane.f32.xlu0 %v1466
    %v1566 = vpop.xlane.xlu0 %1565
    %1567 = vmax.xlane.f32.xlu0 %v1467
    %v1568 = vpop.xlane.xlu0 %1567
    %1569 = vmax.xlane.f32.xlu0 %v1468
    %v1570 = vpop.xlane.xlu0 %1569
    %1571 = vmax.xlane.f32.xlu0 %v1469
    %v1572 = vpop.xlane.xlu0 %1571
    %1573 = vmax.xlane.f32.xlu0 %v1470
    %v1574 = vpop.xlane.xlu0 %1573
    %1575 = vmax.xlane.f32.xlu0 %v1471
    %v1576 = vpop.xlane.xlu0 %1575
    %1577 = vmax.xlane.f32.xlu0 %v1472
    %v1578 = vpop.xlane.xlu0 %1577
    %1579 = vmax.xlane.f32.xlu0 %v1473
    %v1580 = vpop.xlane.xlu0 %1579
    %1581 = vmax.xlane.f32.xlu0 %v1474
    %v1582 = vpop.xlane.xlu0 %1581
    %1583 = vmax.xlane.f32.xlu0 %v1475
    %v1584 = vpop.xlane.xlu0 %1583
    %1585 = vmax.xlane.f32.xlu0 %v1476
    %v1586 = vpop.xlane.xlu0 %1585
    %1587 = vmax.xlane.f32.xlu0 %v1477
    %v1588 = vpop.xlane.xlu0 %1587
    %1589 = vmax.xlane.f32.xlu0 %v1478
    %v1590 = vpop.xlane.xlu0 %1589
    %1591 = vmax.xlane.f32.xlu0 %v1479
    %v1592 = vpop.xlane.xlu0 %1591
    %1593 = vmax.xlane.f32.xlu0 %v1480
    %v1594 = vpop.xlane.xlu0 %1593
    %1595 = vmax.xlane.f32.xlu0 %v1481
    %v1596 = vpop.xlane.xlu0 %1595
    %1597 = vmax.xlane.f32.xlu0 %v1482
    %v1598 = vpop.xlane.xlu0 %1597
    %1599 = vmax.xlane.f32.xlu0 %v1483
    %v1600 = vpop.xlane.xlu0 %1599
    %1601 = vmax.xlane.f32.xlu0 %v1484
    %v1602 = vpop.xlane.xlu0 %1601
    %1603 = vmax.xlane.f32.xlu0 %v1485
    %v1604 = vpop.xlane.xlu0 %1603
    %1605 = vmax.xlane.f32.xlu0 %v1486
    %v1606 = vpop.xlane.xlu0 %1605
    %1607 = vmax.xlane.f32.xlu0 %v1487
    %v1608 = vpop.xlane.xlu0 %1607
    %1609 = vmax.xlane.f32.xlu0 %v1488
    %v1610 = vpop.xlane.xlu0 %1609
    %1611 = vmax.xlane.f32.xlu0 %v1489
    %v1612 = vpop.xlane.xlu0 %1611
    %1613 = vmax.xlane.f32.xlu0 %v1490
    %v1614 = vpop.xlane.xlu0 %1613
    %1615 = vmax.xlane.f32.xlu0 %v1491
    %v1616 = vpop.xlane.xlu0 %1615
    %1617 = vmax.xlane.f32.xlu0 %v1492
    %v1618 = vpop.xlane.xlu0 %1617
    %1619 = vmax.xlane.f32.xlu0 %v1493
    %v1620 = vpop.xlane.xlu0 %1619
    %1621 = vmax.xlane.f32.xlu0 %v1494
    %v1622 = vpop.xlane.xlu0 %1621
    %v1623 = vsub.f32 %v1431, %v1496
    %v1624 = vsub.f32 %v1432, %v1498
    %v1625 = vsub.f32 %v1433, %v1500
    %v1626 = vsub.f32 %v1434, %v1502
    %v1627 = vsub.f32 %v1435, %v1504
    %v1628 = vsub.f32 %v1436, %v1506
    %v1629 = vsub.f32 %v1437, %v1508
    %v1630 = vsub.f32 %v1438, %v1510
    %v1631 = vsub.f32 %v1439, %v1512
    %v1632 = vsub.f32 %v1440, %v1514
    %v1633 = vsub.f32 %v1441, %v1516
    %v1634 = vsub.f32 %v1442, %v1518
    %v1635 = vsub.f32 %v1443, %v1520
    %v1636 = vsub.f32 %v1444, %v1522
    %v1637 = vsub.f32 %v1445, %v1524
    %v1638 = vsub.f32 %v1446, %v1526
    %v1639 = vsub.f32 %v1447, %v1528
    %v1640 = vsub.f32 %v1448, %v1530
    %v1641 = vsub.f32 %v1449, %v1532
    %v1642 = vsub.f32 %v1450, %v1534
    %v1643 = vsub.f32 %v1451, %v1536
    %v1644 = vsub.f32 %v1452, %v1538
    %v1645 = vsub.f32 %v1453, %v1540
    %v1646 = vsub.f32 %v1454, %v1542
    %v1647 = vsub.f32 %v1455, %v1544
    %v1648 = vsub.f32 %v1456, %v1546
    %v1649 = vsub.f32 %v1457, %v1548
    %v1650 = vsub.f32 %v1458, %v1550
    %v1651 = vsub.f32 %v1459, %v1552
    %v1652 = vsub.f32 %v1460, %v1554
    %v1653 = vsub.f32 %v1461, %v1556
    %v1654 = vsub.f32 %v1462, %v1558
    %v1655 = vsub.f32 %v1463, %v1560
    %v1656 = vsub.f32 %v1464, %v1562
    %v1657 = vsub.f32 %v1465, %v1564
    %v1658 = vsub.f32 %v1466, %v1566
    %v1659 = vsub.f32 %v1467, %v1568
    %v1660 = vsub.f32 %v1468, %v1570
    %v1661 = vsub.f32 %v1469, %v1572
    %v1662 = vsub.f32 %v1470, %v1574
    %v1663 = vsub.f32 %v1471, %v1576
    %v1664 = vsub.f32 %v1472, %v1578
    %v1665 = vsub.f32 %v1473, %v1580
    %v1666 = vsub.f32 %v1474, %v1582
    %v1667 = vsub.f32 %v1475, %v1584
    %v1668 = vsub.f32 %v1476, %v1586
    %v1669 = vsub.f32 %v1477, %v1588
    %v1670 = vsub.f32 %v1478, %v1590
    %v1671 = vsub.f32 %v1479, %v1592
    %v1672 = vsub.f32 %v1480, %v1594
    %v1673 = vsub.f32 %v1481, %v1596
    %v1674 = vsub.f32 %v1482, %v1598
    %v1675 = vsub.f32 %v1483, %v1600
    %v1676 = vsub.f32 %v1484, %v1602
    %v1677 = vsub.f32 %v1485, %v1604
    %v1678 = vsub.f32 %v1486, %v1606
    %v1679 = vsub.f32 %v1487, %v1608
    %v1680 = vsub.f32 %v1488, %v1610
    %v1681 = vsub.f32 %v1489, %v1612
    %v1682 = vsub.f32 %v1490, %v1614
    %v1683 = vsub.f32 %v1491, %v1616
    %v1684 = vsub.f32 %v1492, %v1618
    %v1685 = vsub.f32 %v1493, %v1620
    %v1686 = vsub.f32 %v1494, %v1622
    %v1687 = vmul.f32 %v1623, 1.442695
    %v1688 = vpow.pop %v1687
    %v1689 = vmul.f32 %v1624, 1.442695
    %v1690 = vpow.pop %v1689
    %v1691 = vmul.f32 %v1625, 1.442695
    %v1692 = vpow.pop %v1691
    %v1693 = vmul.f32 %v1626, 1.442695
    %v1694 = vpow.pop %v1693
    %v1695 = vmul.f32 %v1627, 1.442695
    %v1696 = vpow.pop %v1695
    %v1697 = vmul.f32 %v1628, 1.442695
    %v1698 = vpow.pop %v1697
    %v1699 = vmul.f32 %v1629, 1.442695
    %v1700 = vpow.pop %v1699
    %v1701 = vmul.f32 %v1630, 1.442695
    %v1702 = vpow.pop %v1701
    %v1703 = vmul.f32 %v1631, 1.442695
    %v1704 = vpow.pop %v1703
    %v1705 = vmul.f32 %v1632, 1.442695
    %v1706 = vpow.pop %v1705
    %v1707 = vmul.f32 %v1633, 1.442695
    %v1708 = vpow.pop %v1707
    %v1709 = vmul.f32 %v1634, 1.442695
    %v1710 = vpow.pop %v1709
    %v1711 = vmul.f32 %v1635, 1.442695
    %v1712 = vpow.pop %v1711
    %v1713 = vmul.f32 %v1636, 1.442695
    %v1714 = vpow.pop %v1713
    %v1715 = vmul.f32 %v1637, 1.442695
    %v1716 = vpow.pop %v1715
    %v1717 = vmul.f32 %v1638, 1.442695
    %v1718 = vpow.pop %v1717
    %v1719 = vmul.f32 %v1639, 1.442695
    %v1720 = vpow.pop %v1719
    %v1721 = vmul.f32 %v1640, 1.442695
    %v1722 = vpow.pop %v1721
    %v1723 = vmul.f32 %v1641, 1.442695
    %v1724 = vpow.pop %v1723
    %v1725 = vmul.f32 %v1642, 1.442695
    %v1726 = vpow.pop %v1725
    %v1727 = vmul.f32 %v1643, 1.442695
    %v1728 = vpow.pop %v1727
    %v1729 = vmul.f32 %v1644, 1.442695
    %v1730 = vpow.pop %v1729
    %v1731 = vmul.f32 %v1645, 1.442695
    %v1732 = vpow.pop %v1731
    %v1733 = vmul.f32 %v1646, 1.442695
    %v1734 = vpow.pop %v1733
    %v1735 = vmul.f32 %v1647, 1.442695
    %v1736 = vpow.pop %v1735
    %v1737 = vmul.f32 %v1648, 1.442695
    %v1738 = vpow.pop %v1737
    %v1739 = vmul.f32 %v1649, 1.442695
    %v1740 = vpow.pop %v1739
    %v1741 = vmul.f32 %v1650, 1.442695
    %v1742 = vpow.pop %v1741
    %v1743 = vmul.f32 %v1651, 1.442695
    %v1744 = vpow.pop %v1743
    %v1745 = vmul.f32 %v1652, 1.442695
    %v1746 = vpow.pop %v1745
    %v1747 = vmul.f32 %v1653, 1.442695
    %v1748 = vpow.pop %v1747
    %v1749 = vmul.f32 %v1654, 1.442695
    %v1750 = vpow.pop %v1749
    %v1751 = vmul.f32 %v1655, 1.442695
    %v1752 = vpow.pop %v1751
    %v1753 = vmul.f32 %v1656, 1.442695
    %v1754 = vpow.pop %v1753
    %v1755 = vmul.f32 %v1657, 1.442695
    %v1756 = vpow.pop %v1755
    %v1757 = vmul.f32 %v1658, 1.442695
    %v1758 = vpow.pop %v1757
    %v1759 = vmul.f32 %v1659, 1.442695
    %v1760 = vpow.pop %v1759
    %v1761 = vmul.f32 %v1660, 1.442695
    %v1762 = vpow.pop %v1761
    %v1763 = vmul.f32 %v1661, 1.442695
    %v1764 = vpow.pop %v1763
    %v1765 = vmul.f32 %v1662, 1.442695
    %v1766 = vpow.pop %v1765
    %v1767 = vmul.f32 %v1663, 1.442695
    %v1768 = vpow.pop %v1767
    %v1769 = vmul.f32 %v1664, 1.442695
    %v1770 = vpow.pop %v1769
    %v1771 = vmul.f32 %v1665, 1.442695
    %v1772 = vpow.pop %v1771
    %v1773 = vmul.f32 %v1666, 1.442695
    %v1774 = vpow.pop %v1773
    %v1775 = vmul.f32 %v1667, 1.442695
    %v1776 = vpow.pop %v1775
    %v1777 = vmul.f32 %v1668, 1.442695
    %v1778 = vpow.pop %v1777
    %v1779 = vmul.f32 %v1669, 1.442695
    %v1780 = vpow.pop %v1779
    %v1781 = vmul.f32 %v1670, 1.442695
    %v1782 = vpow.pop %v1781
    %v1783 = vmul.f32 %v1671, 1.442695
    %v1784 = vpow.pop %v1783
    %v1785 = vmul.f32 %v1672, 1.442695
    %v1786 = vpow.pop %v1785
    %v1787 = vmul.f32 %v1673, 1.442695
    %v1788 = vpow.pop %v1787
    %v1789 = vmul.f32 %v1674, 1.442695
    %v1790 = vpow.pop %v1789
    %v1791 = vmul.f32 %v1675, 1.442695
    %v1792 = vpow.pop %v1791
    %v1793 = vmul.f32 %v1676, 1.442695
    %v1794 = vpow.pop %v1793
    %v1795 = vmul.f32 %v1677, 1.442695
    %v1796 = vpow.pop %v1795
    %v1797 = vmul.f32 %v1678, 1.442695
    %v1798 = vpow.pop %v1797
    %v1799 = vmul.f32 %v1679, 1.442695
    %v1800 = vpow.pop %v1799
    %v1801 = vmul.f32 %v1680, 1.442695
    %v1802 = vpow.pop %v1801
    %v1803 = vmul.f32 %v1681, 1.442695
    %v1804 = vpow.pop %v1803
    %v1805 = vmul.f32 %v1682, 1.442695
    %v1806 = vpow.pop %v1805
    %v1807 = vmul.f32 %v1683, 1.442695
    %v1808 = vpow.pop %v1807
    %v1809 = vmul.f32 %v1684, 1.442695
    %v1810 = vpow.pop %v1809
    %v1811 = vmul.f32 %v1685, 1.442695
    %v1812 = vpow.pop %v1811
    %v1813 = vmul.f32 %v1686, 1.442695
    %v1814 = vpow.pop %v1813
    %1815 = vadd.xlane.f32.xlu0 %v1688
    %v1816 = vpop.xlane.xlu0 %1815
    %1817 = vadd.xlane.f32.xlu0 %v1690
    %v1818 = vpop.xlane.xlu0 %1817
    %1819 = vadd.xlane.f32.xlu0 %v1692
    %v1820 = vpop.xlane.xlu0 %1819
    %1821 = vadd.xlane.f32.xlu0 %v1694
    %v1822 = vpop.xlane.xlu0 %1821
    %1823 = vadd.xlane.f32.xlu0 %v1696
    %v1824 = vpop.xlane.xlu0 %1823
    %1825 = vadd.xlane.f32.xlu0 %v1698
    %v1826 = vpop.xlane.xlu0 %1825
    %1827 = vadd.xlane.f32.xlu0 %v1700
    %v1828 = vpop.xlane.xlu0 %1827
    %1829 = vadd.xlane.f32.xlu0 %v1702
    %v1830 = vpop.xlane.xlu0 %1829
    %1831 = vadd.xlane.f32.xlu0 %v1704
    %v1832 = vpop.xlane.xlu0 %1831
    %1833 = vadd.xlane.f32.xlu0 %v1706
    %v1834 = vpop.xlane.xlu0 %1833
    %1835 = vadd.xlane.f32.xlu0 %v1708
    %v1836 = vpop.xlane.xlu0 %1835
    %1837 = vadd.xlane.f32.xlu0 %v1710
    %v1838 = vpop.xlane.xlu0 %1837
    %1839 = vadd.xlane.f32.xlu0 %v1712
    %v1840 = vpop.xlane.xlu0 %1839
    %1841 = vadd.xlane.f32.xlu0 %v1714
    %v1842 = vpop.xlane.xlu0 %1841
    %1843 = vadd.xlane.f32.xlu0 %v1716
    %v1844 = vpop.xlane.xlu0 %1843
    %1845 = vadd.xlane.f32.xlu0 %v1718
    %v1846 = vpop.xlane.xlu0 %1845
    %1847 = vadd.xlane.f32.xlu0 %v1720
    %v1848 = vpop.xlane.xlu0 %1847
    %1849 = vadd.xlane.f32.xlu0 %v1722
    %v1850 = vpop.xlane.xlu0 %1849
    %1851 = vadd.xlane.f32.xlu0 %v1724
    %v1852 = vpop.xlane.xlu0 %1851
    %1853 = vadd.xlane.f32.xlu0 %v1726
    %v1854 = vpop.xlane.xlu0 %1853
    %1855 = vadd.xlane.f32.xlu0 %v1728
    %v1856 = vpop.xlane.xlu0 %1855
    %1857 = vadd.xlane.f32.xlu0 %v1730
    %v1858 = vpop.xlane.xlu0 %1857
    %1859 = vadd.xlane.f32.xlu0 %v1732
    %v1860 = vpop.xlane.xlu0 %1859
    %1861 = vadd.xlane.f32.xlu0 %v1734
    %v1862 = vpop.xlane.xlu0 %1861
    %1863 = vadd.xlane.f32.xlu0 %v1736
    %v1864 = vpop.xlane.xlu0 %1863
    %1865 = vadd.xlane.f32.xlu0 %v1738
    %v1866 = vpop.xlane.xlu0 %1865
    %1867 = vadd.xlane.f32.xlu0 %v1740
    %v1868 = vpop.xlane.xlu0 %1867
    %1869 = vadd.xlane.f32.xlu0 %v1742
    %v1870 = vpop.xlane.xlu0 %1869
    %1871 = vadd.xlane.f32.xlu0 %v1744
    %v1872 = vpop.xlane.xlu0 %1871
    %1873 = vadd.xlane.f32.xlu0 %v1746
    %v1874 = vpop.xlane.xlu0 %1873
    %1875 = vadd.xlane.f32.xlu0 %v1748
    %v1876 = vpop.xlane.xlu0 %1875
    %1877 = vadd.xlane.f32.xlu0 %v1750
    %v1878 = vpop.xlane.xlu0 %1877
    %1879 = vadd.xlane.f32.xlu0 %v1752
    %v1880 = vpop.xlane.xlu0 %1879
    %1881 = vadd.xlane.f32.xlu0 %v1754
    %v1882 = vpop.xlane.xlu0 %1881
    %1883 = vadd.xlane.f32.xlu0 %v1756
    %v1884 = vpop.xlane.xlu0 %1883
    %1885 = vadd.xlane.f32.xlu0 %v1758
    %v1886 = vpop.xlane.xlu0 %1885
    %1887 = vadd.xlane.f32.xlu0 %v1760
    %v1888 = vpop.xlane.xlu0 %1887
    %1889 = vadd.xlane.f32.xlu0 %v1762
    %v1890 = vpop.xlane.xlu0 %1889
    %1891 = vadd.xlane.f32.xlu0 %v1764
    %v1892 = vpop.xlane.xlu0 %1891
    %1893 = vadd.xlane.f32.xlu0 %v1766
    %v1894 = vpop.xlane.xlu0 %1893
    %1895 = vadd.xlane.f32.xlu0 %v1768
    %v1896 = vpop.xlane.xlu0 %1895
    %1897 = vadd.xlane.f32.xlu0 %v1770
    %v1898 = vpop.xlane.xlu0 %1897
    %1899 = vadd.xlane.f32.xlu0 %v1772
    %v1900 = vpop.xlane.xlu0 %1899
    %1901 = vadd.xlane.f32.xlu0 %v1774
    %v1902 = vpop.xlane.xlu0 %1901
    %1903 = vadd.xlane.f32.xlu0 %v1776
    %v1904 = vpop.xlane.xlu0 %1903
    %1905 = vadd.xlane.f32.xlu0 %v1778
    %v1906 = vpop.xlane.xlu0 %1905
    %1907 = vadd.xlane.f32.xlu0 %v1780
    %v1908 = vpop.xlane.xlu0 %1907
    %1909 = vadd.xlane.f32.xlu0 %v1782
    %v1910 = vpop.xlane.xlu0 %1909
    %1911 = vadd.xlane.f32.xlu0 %v1784
    %v1912 = vpop.xlane.xlu0 %1911
    %1913 = vadd.xlane.f32.xlu0 %v1786
    %v1914 = vpop.xlane.xlu0 %1913
    %1915 = vadd.xlane.f32.xlu0 %v1788
    %v1916 = vpop.xlane.xlu0 %1915
    %1917 = vadd.xlane.f32.xlu0 %v1790
    %v1918 = vpop.xlane.xlu0 %1917
    %1919 = vadd.xlane.f32.xlu0 %v1792
    %v1920 = vpop.xlane.xlu0 %1919
    %1921 = vadd.xlane.f32.xlu0 %v1794
    %v1922 = vpop.xlane.xlu0 %1921
    %1923 = vadd.xlane.f32.xlu0 %v1796
    %v1924 = vpop.xlane.xlu0 %1923
    %1925 = vadd.xlane.f32.xlu0 %v1798
    %v1926 = vpop.xlane.xlu0 %1925
    %1927 = vadd.xlane.f32.xlu0 %v1800
    %v1928 = vpop.xlane.xlu0 %1927
    %1929 = vadd.xlane.f32.xlu0 %v1802
    %v1930 = vpop.xlane.xlu0 %1929
    %1931 = vadd.xlane.f32.xlu0 %v1804
    %v1932 = vpop.xlane.xlu0 %1931
    %1933 = vadd.xlane.f32.xlu0 %v1806
    %v1934 = vpop.xlane.xlu0 %1933
    %1935 = vadd.xlane.f32.xlu0 %v1808
    %v1936 = vpop.xlane.xlu0 %1935
    %1937 = vadd.xlane.f32.xlu0 %v1810
    %v1938 = vpop.xlane.xlu0 %1937
    %1939 = vadd.xlane.f32.xlu0 %v1812
    %v1940 = vpop.xlane.xlu0 %1939
    %1941 = vadd.xlane.f32.xlu0 %v1814
    %v1942 = vpop.xlane.xlu0 %1941
    %v1943 = vrcp.pop %v1816
    %v1944 = vrcp.pop %v1818
    %v1945 = vrcp.pop %v1820
    %v1946 = vrcp.pop %v1822
    %v1947 = vrcp.pop %v1824
    %v1948 = vrcp.pop %v1826
    %v1949 = vrcp.pop %v1828
    %v1950 = vrcp.pop %v1830
    %v1951 = vrcp.pop %v1832
    %v1952 = vrcp.pop %v1834
    %v1953 = vrcp.pop %v1836
    %v1954 = vrcp.pop %v1838
    %v1955 = vrcp.pop %v1840
    %v1956 = vrcp.pop %v1842
    %v1957 = vrcp.pop %v1844
    %v1958 = vrcp.pop %v1846
    %v1959 = vrcp.pop %v1848
    %v1960 = vrcp.pop %v1850
    %v1961 = vrcp.pop %v1852
    %v1962 = vrcp.pop %v1854
    %v1963 = vrcp.pop %v1856
    %v1964 = vrcp.pop %v1858
    %v1965 = vrcp.pop %v1860
    %v1966 = vrcp.pop %v1862
    %v1967 = vrcp.pop %v1864
    %v1968 = vrcp.pop %v1866
    %v1969 = vrcp.pop %v1868
    %v1970 = vrcp.pop %v1870
    %v1971 = vrcp.pop %v1872
    %v1972 = vrcp.pop %v1874
    %v1973 = vrcp.pop %v1876
    %v1974 = vrcp.pop %v1878
    %v1975 = vrcp.pop %v1880
    %v1976 = vrcp.pop %v1882
    %v1977 = vrcp.pop %v1884
    %v1978 = vrcp.pop %v1886
    %v1979 = vrcp.pop %v1888
    %v1980 = vrcp.pop %v1890
    %v1981 = vrcp.pop %v1892
    %v1982 = vrcp.pop %v1894
    %v1983 = vrcp.pop %v1896
    %v1984 = vrcp.pop %v1898
    %v1985 = vrcp.pop %v1900
    %v1986 = vrcp.pop %v1902
    %v1987 = vrcp.pop %v1904
    %v1988 = vrcp.pop %v1906
    %v1989 = vrcp.pop %v1908
    %v1990 = vrcp.pop %v1910
    %v1991 = vrcp.pop %v1912
    %v1992 = vrcp.pop %v1914
    %v1993 = vrcp.pop %v1916
    %v1994 = vrcp.pop %v1918
    %v1995 = vrcp.pop %v1920
    %v1996 = vrcp.pop %v1922
    %v1997 = vrcp.pop %v1924
    %v1998 = vrcp.pop %v1926
    %v1999 = vrcp.pop %v1928
    %v2000 = vrcp.pop %v1930
    %v2001 = vrcp.pop %v1932
    %v2002 = vrcp.pop %v1934
    %v2003 = vrcp.pop %v1936
    %v2004 = vrcp.pop %v1938
    %v2005 = vrcp.pop %v1940
    %v2006 = vrcp.pop %v1942
    %v2007 = vmul.f32 %v1688, %v1943
    %v2008 = vmul.f32 %v1690, %v1944
    %v2009 = vmul.f32 %v1692, %v1945
    %v2010 = vmul.f32 %v1694, %v1946
    %v2011 = vmul.f32 %v1696, %v1947
    %v2012 = vmul.f32 %v1698, %v1948
    %v2013 = vmul.f32 %v1700, %v1949
    %v2014 = vmul.f32 %v1702, %v1950
    %v2015 = vmul.f32 %v1704, %v1951
    %v2016 = vmul.f32 %v1706, %v1952
    %v2017 = vmul.f32 %v1708, %v1953
    %v2018 = vmul.f32 %v1710, %v1954
    %v2019 = vmul.f32 %v1712, %v1955
    %v2020 = vmul.f32 %v1714, %v1956
    %v2021 = vmul.f32 %v1716, %v1957
    %v2022 = vmul.f32 %v1718, %v1958
    %v2023 = vmul.f32 %v1720, %v1959
    %v2024 = vmul.f32 %v1722, %v1960
    %v2025 = vmul.f32 %v1724, %v1961
    %v2026 = vmul.f32 %v1726, %v1962
    %v2027 = vmul.f32 %v1728, %v1963
    %v2028 = vmul.f32 %v1730, %v1964
    %v2029 = vmul.f32 %v1732, %v1965
    %v2030 = vmul.f32 %v1734, %v1966
    %v2031 = vmul.f32 %v1736, %v1967
    %v2032 = vmul.f32 %v1738, %v1968
    %v2033 = vmul.f32 %v1740, %v1969
    %v2034 = vmul.f32 %v1742, %v1970
    %v2035 = vmul.f32 %v1744, %v1971
    %v2036 = vmul.f32 %v1746, %v1972
    %v2037 = vmul.f32 %v1748, %v1973
    %v2038 = vmul.f32 %v1750, %v1974
    %v2039 = vmul.f32 %v1752, %v1975
    %v2040 = vmul.f32 %v1754, %v1976
    %v2041 = vmul.f32 %v1756, %v1977
    %v2042 = vmul.f32 %v1758, %v1978
    %v2043 = vmul.f32 %v1760, %v1979
    %v2044 = vmul.f32 %v1762, %v1980
    %v2045 = vmul.f32 %v1764, %v1981
    %v2046 = vmul.f32 %v1766, %v1982
    %v2047 = vmul.f32 %v1768, %v1983
    %v2048 = vmul.f32 %v1770, %v1984
    %v2049 = vmul.f32 %v1772, %v1985
    %v2050 = vmul.f32 %v1774, %v1986
    %v2051 = vmul.f32 %v1776, %v1987
    %v2052 = vmul.f32 %v1778, %v1988
    %v2053 = vmul.f32 %v1780, %v1989
    %v2054 = vmul.f32 %v1782, %v1990
    %v2055 = vmul.f32 %v1784, %v1991
    %v2056 = vmul.f32 %v1786, %v1992
    %v2057 = vmul.f32 %v1788, %v1993
    %v2058 = vmul.f32 %v1790, %v1994
    %v2059 = vmul.f32 %v1792, %v1995
    %v2060 = vmul.f32 %v1794, %v1996
    %v2061 = vmul.f32 %v1796, %v1997
    %v2062 = vmul.f32 %v1798, %v1998
    %v2063 = vmul.f32 %v1800, %v1999
    %v2064 = vmul.f32 %v1802, %v2000
    %v2065 = vmul.f32 %v1804, %v2001
    %v2066 = vmul.f32 %v1806, %v2002
    %v2067 = vmul.f32 %v1808, %v2003
    %v2068 = vmul.f32 %v1810, %v2004
    %v2069 = vmul.f32 %v1812, %v2005
    %v2070 = vmul.f32 %v1814, %v2006
    %v2071 = vpack.c.bf16 %v2008, %v2007
    %v2072 = vpack.c.bf16 %v2010, %v2009
    %v2073 = vpack.c.bf16 %v2012, %v2011
    %v2074 = vpack.c.bf16 %v2014, %v2013
    %v2075 = vpack.c.bf16 %v2016, %v2015
    %v2076 = vpack.c.bf16 %v2018, %v2017
    %v2077 = vpack.c.bf16 %v2020, %v2019
    %v2078 = vpack.c.bf16 %v2022, %v2021
    %v2079 = vpack.c.bf16 %v2024, %v2023
    %v2080 = vpack.c.bf16 %v2026, %v2025
    %v2081 = vpack.c.bf16 %v2028, %v2027
    %v2082 = vpack.c.bf16 %v2030, %v2029
    %v2083 = vpack.c.bf16 %v2032, %v2031
    %v2084 = vpack.c.bf16 %v2034, %v2033
    %v2085 = vpack.c.bf16 %v2036, %v2035
    %v2086 = vpack.c.bf16 %v2038, %v2037
    %v2087 = vpack.c.bf16 %v2040, %v2039
    %v2088 = vpack.c.bf16 %v2042, %v2041
    %v2089 = vpack.c.bf16 %v2044, %v2043
    %v2090 = vpack.c.bf16 %v2046, %v2045
    %v2091 = vpack.c.bf16 %v2048, %v2047
    %v2092 = vpack.c.bf16 %v2050, %v2049
    %v2093 = vpack.c.bf16 %v2052, %v2051
    %v2094 = vpack.c.bf16 %v2054, %v2053
    %v2095 = vpack.c.bf16 %v2056, %v2055
    %v2096 = vpack.c.bf16 %v2058, %v2057
    %v2097 = vpack.c.bf16 %v2060, %v2059
    %v2098 = vpack.c.bf16 %v2062, %v2061
    %v2099 = vpack.c.bf16 %v2064, %v2063
    %v2100 = vpack.c.bf16 %v2066, %v2065
    %v2101 = vpack.c.bf16 %v2068, %v2067
    %v2102 = vpack.c.bf16 %v2070, %v2069
    %v2135 = vunpack.c.l.b16 %v2071
    %v2136 = vunpack.c.h.b16 %v2071
    %v2137 = vunpack.c.l.b16 %v2072
    %v2138 = vunpack.c.h.b16 %v2072
    %v2139 = vunpack.c.l.b16 %v2073
    %v2140 = vunpack.c.h.b16 %v2073
    %v2141 = vunpack.c.l.b16 %v2074
    %v2142 = vunpack.c.h.b16 %v2074
    %v2143 = vunpack.c.l.b16 %v2075
    %v2144 = vunpack.c.h.b16 %v2075
    %v2145 = vunpack.c.l.b16 %v2076
    %v2146 = vunpack.c.h.b16 %v2076
    %v2147 = vunpack.c.l.b16 %v2077
    %v2148 = vunpack.c.h.b16 %v2077
    %v2149 = vunpack.c.l.b16 %v2078
    %v2150 = vunpack.c.h.b16 %v2078
    %v2151 = vunpack.c.l.b16 %v2079
    %v2152 = vunpack.c.h.b16 %v2079
    %v2153 = vunpack.c.l.b16 %v2080
    %v2154 = vunpack.c.h.b16 %v2080
    %v2155 = vunpack.c.l.b16 %v2081
    %v2156 = vunpack.c.h.b16 %v2081
    %v2157 = vunpack.c.l.b16 %v2082
    %v2158 = vunpack.c.h.b16 %v2082
    %v2159 = vunpack.c.l.b16 %v2083
    %v2160 = vunpack.c.h.b16 %v2083
    %v2161 = vunpack.c.l.b16 %v2084
    %v2162 = vunpack.c.h.b16 %v2084
    %v2163 = vunpack.c.l.b16 %v2085
    %v2164 = vunpack.c.h.b16 %v2085
    %v2165 = vunpack.c.l.b16 %v2086
    %v2166 = vunpack.c.h.b16 %v2086
    %v2167 = vunpack.c.l.b16 %v2087
    %v2168 = vunpack.c.h.b16 %v2087
    %v2169 = vunpack.c.l.b16 %v2088
    %v2170 = vunpack.c.h.b16 %v2088
    %v2171 = vunpack.c.l.b16 %v2089
    %v2172 = vunpack.c.h.b16 %v2089
    %v2173 = vunpack.c.l.b16 %v2090
    %v2174 = vunpack.c.h.b16 %v2090
    %v2175 = vunpack.c.l.b16 %v2091
    %v2176 = vunpack.c.h.b16 %v2091
    %v2177 = vunpack.c.l.b16 %v2092
    %v2178 = vunpack.c.h.b16 %v2092
    %v2179 = vunpack.c.l.b16 %v2093
    %v2180 = vunpack.c.h.b16 %v2093
    %v2181 = vunpack.c.l.b16 %v2094
    %v2182 = vunpack.c.h.b16 %v2094
    %v2183 = vunpack.c.l.b16 %v2095
    %v2184 = vunpack.c.h.b16 %v2095
    %v2185 = vunpack.c.l.b16 %v2096
    %v2186 = vunpack.c.h.b16 %v2096
    %v2187 = vunpack.c.l.b16 %v2097
    %v2188 = vunpack.c.h.b16 %v2097
    %v2189 = vunpack.c.l.b16 %v2098
    %v2190 = vunpack.c.h.b16 %v2098
    %v2191 = vunpack.c.l.b16 %v2099
    %v2192 = vunpack.c.h.b16 %v2099
    %v2193 = vunpack.c.l.b16 %v2100
    %v2194 = vunpack.c.h.b16 %v2100
    %v2195 = vunpack.c.l.b16 %v2101
    %v2196 = vunpack.c.h.b16 %v2101
    %v2197 = vunpack.c.l.b16 %v2102
    %v2198 = vunpack.c.h.b16 %v2102
    %v2199 = vpack.c.b16 %v2135, %v2135
    %v2200 = vpack.c.b16 %v2136, %v2136
    %v2201 = vpack.c.b16 %v2137, %v2137
    %v2202 = vpack.c.b16 %v2138, %v2138
    %v2203 = vpack.c.b16 %v2139, %v2139
    %v2204 = vpack.c.b16 %v2140, %v2140
    %v2205 = vpack.c.b16 %v2141, %v2141
    %v2206 = vpack.c.b16 %v2142, %v2142
    %v2207 = vpack.c.b16 %v2143, %v2143
    %v2208 = vpack.c.b16 %v2144, %v2144
    %v2209 = vpack.c.b16 %v2145, %v2145
    %v2210 = vpack.c.b16 %v2146, %v2146
    %v2211 = vpack.c.b16 %v2147, %v2147
    %v2212 = vpack.c.b16 %v2148, %v2148
    %v2213 = vpack.c.b16 %v2149, %v2149
    %v2214 = vpack.c.b16 %v2150, %v2150
    %v2215 = vpack.c.b16 %v2151, %v2151
    %v2216 = vpack.c.b16 %v2152, %v2152
    %v2217 = vpack.c.b16 %v2153, %v2153
    %v2218 = vpack.c.b16 %v2154, %v2154
    %v2219 = vpack.c.b16 %v2155, %v2155
    %v2220 = vpack.c.b16 %v2156, %v2156
    %v2221 = vpack.c.b16 %v2157, %v2157
    %v2222 = vpack.c.b16 %v2158, %v2158
    %v2223 = vpack.c.b16 %v2159, %v2159
    %v2224 = vpack.c.b16 %v2160, %v2160
    %v2225 = vpack.c.b16 %v2161, %v2161
    %v2226 = vpack.c.b16 %v2162, %v2162
    %v2227 = vpack.c.b16 %v2163, %v2163
    %v2228 = vpack.c.b16 %v2164, %v2164
    %v2229 = vpack.c.b16 %v2165, %v2165
    %v2230 = vpack.c.b16 %v2166, %v2166
    %v2231 = vpack.c.b16 %v2167, %v2167
    %v2232 = vpack.c.b16 %v2168, %v2168
    %v2233 = vpack.c.b16 %v2169, %v2169
    %v2234 = vpack.c.b16 %v2170, %v2170
    %v2235 = vpack.c.b16 %v2171, %v2171
    %v2236 = vpack.c.b16 %v2172, %v2172
    %v2237 = vpack.c.b16 %v2173, %v2173
    %v2238 = vpack.c.b16 %v2174, %v2174
    %v2239 = vpack.c.b16 %v2175, %v2175
    %v2240 = vpack.c.b16 %v2176, %v2176
    %v2241 = vpack.c.b16 %v2177, %v2177
    %v2242 = vpack.c.b16 %v2178, %v2178
    %v2243 = vpack.c.b16 %v2179, %v2179
    %v2244 = vpack.c.b16 %v2180, %v2180
    %v2245 = vpack.c.b16 %v2181, %v2181
    %v2246 = vpack.c.b16 %v2182, %v2182
    %v2247 = vpack.c.b16 %v2183, %v2183
    %v2248 = vpack.c.b16 %v2184, %v2184
    %v2249 = vpack.c.b16 %v2185, %v2185
    %v2250 = vpack.c.b16 %v2186, %v2186
    %v2251 = vpack.c.b16 %v2187, %v2187
    %v2252 = vpack.c.b16 %v2188, %v2188
    %v2253 = vpack.c.b16 %v2189, %v2189
    %v2254 = vpack.c.b16 %v2190, %v2190
    %v2255 = vpack.c.b16 %v2191, %v2191
    %v2256 = vpack.c.b16 %v2192, %v2192
    %v2257 = vpack.c.b16 %v2193, %v2193
    %v2258 = vpack.c.b16 %v2194, %v2194
    %v2259 = vpack.c.b16 %v2195, %v2195
    %v2260 = vpack.c.b16 %v2196, %v2196
    %v2261 = vpack.c.b16 %v2197, %v2197
    %v2262 = vpack.c.b16 %v2198, %v2198
    %2327 = vst [vmem:[#allocation2] sm:$0xf] %v2199
    %2328 = vst [vmem:[#allocation2 + $0x4] sm:$0xf] %v2200
    %2329 = vst [vmem:[#allocation2 + $0x8] sm:$0xf] %v2201
    %2330 = vst [vmem:[#allocation2 + $0xc] sm:$0xf] %v2202
    %2331 = vst [vmem:[#allocation2 + $0x10] sm:$0xf] %v2203
    %2332 = vst [vmem:[#allocation2 + $0x14] sm:$0xf] %v2204
    %2333 = vst [vmem:[#allocation2 + $0x18] sm:$0xf] %v2205
    %2334 = vst [vmem:[#allocation2 + $0x1c] sm:$0xf] %v2206
    %2335 = vst [vmem:[#allocation2 + $0x20] sm:$0xf] %v2207
    %2336 = vst [vmem:[#allocation2 + $0x24] sm:$0xf] %v2208
    %2337 = vst [vmem:[#allocation2 + $0x28] sm:$0xf] %v2209
    %2338 = vst [vmem:[#allocation2 + $0x2c] sm:$0xf] %v2210
    %2339 = vst [vmem:[#allocation2 + $0x30] sm:$0xf] %v2211
    %2340 = vst [vmem:[#allocation2 + $0x34] sm:$0xf] %v2212
    %2341 = vst [vmem:[#allocation2 + $0x38] sm:$0xf] %v2213
    %2342 = vst [vmem:[#allocation2 + $0x3c] sm:$0xf] %v2214
    %2343 = vst [vmem:[#allocation2 + $0x40] sm:$0xf] %v2215
    %2344 = vst [vmem:[#allocation2 + $0x44] sm:$0xf] %v2216
    %2345 = vst [vmem:[#allocation2 + $0x48] sm:$0xf] %v2217
    %2346 = vst [vmem:[#allocation2 + $0x4c] sm:$0xf] %v2218
    %2347 = vst [vmem:[#allocation2 + $0x50] sm:$0xf] %v2219
    %2348 = vst [vmem:[#allocation2 + $0x54] sm:$0xf] %v2220
    %2349 = vst [vmem:[#allocation2 + $0x58] sm:$0xf] %v2221
    %2350 = vst [vmem:[#allocation2 + $0x5c] sm:$0xf] %v2222
    %2351 = vst [vmem:[#allocation2 + $0x60] sm:$0xf] %v2223
    %2352 = vst [vmem:[#allocation2 + $0x64] sm:$0xf] %v2224
    %2353 = vst [vmem:[#allocation2 + $0x68] sm:$0xf] %v2225
    %2354 = vst [vmem:[#allocation2 + $0x6c] sm:$0xf] %v2226
    %2355 = vst [vmem:[#allocation2 + $0x70] sm:$0xf] %v2227
    %2356 = vst [vmem:[#allocation2 + $0x74] sm:$0xf] %v2228
    %2357 = vst [vmem:[#allocation2 + $0x78] sm:$0xf] %v2229
    %2358 = vst [vmem:[#allocation2 + $0x7c] sm:$0xf] %v2230
    %2359 = vst [vmem:[#allocation2 + $0x80] sm:$0xf] %v2231
    %2360 = vst [vmem:[#allocation2 + $0x84] sm:$0xf] %v2232
    %2361 = vst [vmem:[#allocation2 + $0x88] sm:$0xf] %v2233
    %2362 = vst [vmem:[#allocation2 + $0x8c] sm:$0xf] %v2234
    %2363 = vst [vmem:[#allocation2 + $0x90] sm:$0xf] %v2235
    %2364 = vst [vmem:[#allocation2 + $0x94] sm:$0xf] %v2236
    %2365 = vst [vmem:[#allocation2 + $0x98] sm:$0xf] %v2237
    %2366 = vst [vmem:[#allocation2 + $0x9c] sm:$0xf] %v2238
    %2367 = vst [vmem:[#allocation2 + $0xa0] sm:$0xf] %v2239
    %2368 = vst [vmem:[#allocation2 + $0xa4] sm:$0xf] %v2240
    %2369 = vst [vmem:[#allocation2 + $0xa8] sm:$0xf] %v2241
    %2370 = vst [vmem:[#allocation2 + $0xac] sm:$0xf] %v2242
    %2371 = vst [vmem:[#allocation2 + $0xb0] sm:$0xf] %v2243
    %2372 = vst [vmem:[#allocation2 + $0xb4] sm:$0xf] %v2244
    %2373 = vst [vmem:[#allocation2 + $0xb8] sm:$0xf] %v2245
    %2374 = vst [vmem:[#allocation2 + $0xbc] sm:$0xf] %v2246
    %2375 = vst [vmem:[#allocation2 + $0xc0] sm:$0xf] %v2247
    %2376 = vst [vmem:[#allocation2 + $0xc4] sm:$0xf] %v2248
    %2377 = vst [vmem:[#allocation2 + $0xc8] sm:$0xf] %v2249
    %2378 = vst [vmem:[#allocation2 + $0xcc] sm:$0xf] %v2250
    %2379 = vst [vmem:[#allocation2 + $0xd0] sm:$0xf] %v2251
    %2380 = vst [vmem:[#allocation2 + $0xd4] sm:$0xf] %v2252
    %2381 = vst [vmem:[#allocation2 + $0xd8] sm:$0xf] %v2253
    %2382 = vst [vmem:[#allocation2 + $0xdc] sm:$0xf] %v2254
    %2383 = vst [vmem:[#allocation2 + $0xe0] sm:$0xf] %v2255
    %2384 = vst [vmem:[#allocation2 + $0xe4] sm:$0xf] %v2256
    %2385 = vst [vmem:[#allocation2 + $0xe8] sm:$0xf] %v2257
    %2386 = vst [vmem:[#allocation2 + $0xec] sm:$0xf] %v2258
    %2387 = vst [vmem:[#allocation2 + $0xf0] sm:$0xf] %v2259
    %2388 = vst [vmem:[#allocation2 + $0xf4] sm:$0xf] %v2260
    %2389 = vst [vmem:[#allocation2 + $0xf8] sm:$0xf] %v2261
    %2390 = vst [vmem:[#allocation2 + $0xfc] sm:$0xf] %v2262
    // Predicated region
    $region18: #{tpu_custom_call.1} parent=1 // pred_check
      _
    $region19: #{tpu_custom_call.1} parent=1 // pred_check_branch
      %2392 = sbr.rel (0) target = $region21
    $region20: #{tpu_custom_call.1} parent=1 // pred_region
      %s2394 = ssub.s32 4096, 4096
      %2395 = vsyncadd [#allocation3], %s2394
      %s2396 = sshll.u32 [#allocation2], 4
      %s2397 = int_to_ptr.vmem [resolvable:$true] %s2396
      %2402 = dma.vmem_to_hbm [thread:$0]  %s2397, 4096, %s4, [#allocation3], 64, 64, 4
    $region21: #{tpu_custom_call.1} parent=1 // pred_fallthru
      _
    // Predicated region
    $region22: #{tpu_custom_call.1} parent=1 // pred_check
      _
    $region23: #{tpu_custom_call.1} parent=1 // pred_check_branch
      %2404 = sbr.rel (0) target = $region25
    $region24: #{tpu_custom_call.1} parent=1 // pred_region
      %2405 = dma.done [#allocation3], 4096
    $region25: #{tpu_custom_call.1} parent=1 // pred_fallthru
      _
    %2406 = vsyncpa [#allocation3], 1

</llo_original>
